<compile_context>
chip_gen: v7x
topology: tpu7x:2x2x1
jax: 0.10.0
libtpu: 0.0.40
codegen_flags: <defaults>
</compile_context>

<pallas_src>
import functools
import math

import jax
import jax.numpy as jnp
import numpy as np
from jax.experimental import pallas as pl
from jax.experimental.pallas import tpu as pltpu
from jax.scipy.linalg import block_diag

_SQRT2_RECIP = 1.0 / math.sqrt(2.0)
_GELU_TANH_C = math.sqrt(2.0 / math.pi)


def _lfpe_kernel(x_ref, wr_ref, w1c_ref, w1s_ref, b1_ref, w2_ref, b2_ref,
                 o_ref, *, G, M, approximate_gelu):
    """One (row_tile, D) output tile.

    x_ref:   (TN, G*M) f32      row tile, the G groups side by side on lanes
    wr_ref:  (M,  F2)  f32      shared per-group Wr^T (projection kept f32)
    w1c_ref: (F2, H)   f32/bf16 (1/sqrt(F)) * W1^T cos half (shared)
    w1s_ref: (F2, H)   f32/bf16 (1/sqrt(F)) * W1^T sin half (shared)
    b1_ref:  (1,  H)   f32
    w2_ref:  (G*H, D)  f32/bf16 block-diagonal W2^T (keeps output lane-dense)
    b2_ref:  (1,  D)   f32
    o_ref:   (TN, D)            lane-dense output tile
    """
    mm_dtype = w1c_ref.dtype  # weights pre-cast in the wrapper; no per-step cast

    h_parts = []
    for g in range(G):  # static python loop; G is small, loop fully unrolls
        xg = x_ref[:, g * M:(g + 1) * M]                         # (TN, M) f32
        # Skinny projection stays on the MXU (it has slack; VPU is the
        # binding slot here).
        proj = jnp.dot(xg, wr_ref[...],
                       preferred_element_type=jnp.float32)       # (TN, F2)

        c = jnp.cos(proj).astype(mm_dtype)
        s = jnp.sin(proj).astype(mm_dtype)

        # F @ W1 + b1 with F = (1/sqrt(F_dim)) * [cos, sin]; the scale is
        # folded into w1c/w1s and the lane concat is replaced by two
        # accumulating matmuls.
        h = (jnp.dot(c, w1c_ref[...], preferred_element_type=jnp.float32)
             + jnp.dot(s, w1s_ref[...], preferred_element_type=jnp.float32)
             + b1_ref[...])                                      # (TN, H) f32

        if approximate_gelu:
            # tanh GELU -> EUP slot (frees the VPU); not bit-exact vs torch.
            h = 0.5 * h * (1.0 + jnp.tanh(
                jnp.float32(_GELU_TANH_C) * (h + 0.044715 * h * h * h)))
        else:
            # exact erf GELU (matches torch.nn.GELU() default)
            h = 0.5 * h * (1.0 + jax.lax.erf(h * jnp.float32(_SQRT2_RECIP)))

        h_parts.append(h.astype(mm_dtype))

    # Lane-concat of the per-group hidden states; single block-diag W2 matmul
    # keeps the (TN, D) store lane-dense (group-major along D, matching the
    # module's Y.reshape(N, D)).
    h_all = h_parts[0] if G == 1 else jnp.concatenate(h_parts, axis=-1)
    y = jnp.dot(h_all, w2_ref[...],
                preferred_element_type=jnp.float32) + b2_ref[...]
    o_ref[...] = y.astype(o_ref.dtype)


def learnable_fourier_pos_encoding(x, params, *, G, M, F_dim, H_dim, D,
                                   row_tile=None, use_bf16_matmul=False,
                                   approximate_gelu=False, out_dtype=None):
    """x: [N, G, M] float32  ->  PEx: [N, D] (out_dtype, default x.dtype)."""
    N = x.shape[0]
    assert x.shape == (N, G, M)
    F2 = F_dim // 2
    Dg = D // G
    assert G * Dg == D and 2 * F2 == F_dim

    wr_t, w1_t, b1, w2_t, b2 = params  # per-group weights, [in, out] layout
    out_dtype = x.dtype if out_dtype is None else out_dtype
    mm_dtype = jnp.bfloat16 if use_bf16_matmul else jnp.float32

    # --- weights, built (and cast) once outside the kernel -----------------
    scale = jnp.float32(1.0 / math.sqrt(F_dim))
    wr = wr_t.astype(jnp.float32)                         # (M, F2)  keep f32
    w1c = (scale * w1_t[:F2, :]).astype(mm_dtype)         # (F2, H)  cos half
    w1s = (scale * w1_t[F2:, :]).astype(mm_dtype)         # (F2, H)  sin half
    b1_full = b1.reshape(1, H_dim).astype(jnp.float32)    # (1, H)
    # Only W2 is block-diagonal: it maps the lane-concatenated (TN, G*H)
    # hidden state to the lane-dense (TN, D) output slab.
    w2_bd = block_diag(*([w2_t] * G)).astype(mm_dtype)    # (G*H, D)
    b2_full = jnp.tile(b2, G).reshape(1, D).astype(jnp.float32)

    # --- generation-aware tile / VMEM budget --------------------------------
    try:
        vmem_cap = int(pltpu.get_tpu_info().vmem_capacity_bytes)
    except Exception:
        vmem_cap = 128 * 2**20
    if vmem_cap <= 64 * 2**20:          # v7x-class: 64 MiB VMEM per TC
        vmem_soft_cap = 40 * 2**20
        default_tile = 256
    else:                               # v5e / v6e: 128 MiB VMEM
        vmem_soft_cap = 64 * 2**20
        default_tile = 512

    def rup(a, b):
        return ((a + b - 1) // b) * b

    row_tile = default_tile if row_tile is None else int(row_tile)
    row_tile = max(8, rup(row_tile, 8))
    row_tile = min(row_tile, rup(N, 8))
    if N > 8:
        # >= 2 grid steps so both TCs get work on v7x (harmless elsewhere:
        # per-step overhead is ~0.35 us).
        row_tile = min(row_tile, rup(-(-N // 2), 8))

    # VMEM estimate with 128-lane / 8-sublane padding; weights single-buffered.
    lane = lambda c: rup(max(c, 128), 128)
    wsz = 2 if use_bf16_matmul else 4
    weight_bytes = (rup(M, 8) * lane(F2) * 4
                    + 2 * rup(F2, 8) * lane(H_dim) * wsz
                    + rup(G * H_dim, 8) * lane(D) * wsz
                    + 8 * lane(H_dim) * 4 + 8 * lane(D) * 4)

    def tile_bytes(t):
        xo = 2 * t * (lane(G * M) * 4 + lane(D) * jnp.dtype(out_dtype).itemsize)
        inter = t * (3 * lane(F2) + 2 * lane(H_dim)
                     + lane(G * H_dim) + lane(D)) * 4
        return xo + inter

    while row_tile > 8 and tile_bytes(row_tile) + weight_bytes > vmem_soft_cap:
        row_tile = max(8, rup(row_tile // 2, 8))
    est = tile_bytes(row_tile) + weight_bytes
    vmem_limit = int(min(vmem_soft_cap, max(8 * 2**20, 2 * est)))

    n_pad = pl.cdiv(N, row_tile) * row_tile
    x_flat = x.reshape(N, G * M).astype(jnp.float32)
    if n_pad != N:
        x_flat = jnp.pad(x_flat, ((0, n_pad - N), (0, 0)))
    grid = (n_pad // row_tile,)

    # --- advisory cost estimate ---------------------------------------------
    flops = n_pad * (G * (2 * M * F2 + 4 * F2 * H_dim) + 2 * G * H_dim * D)
    transcendentals = n_pad * G * (2 * F2 + H_dim)
    bytes_accessed = (4 * n_pad * G * M
                      + jnp.dtype(out_dtype).itemsize * n_pad * D
                      + weight_bytes)

    kernel = functools.partial(_lfpe_kernel, G=G, M=M,
                               approximate_gelu=approximate_gelu)

    def const_spec(shape):
        # Constant-index operands: never re-DMA'd, single-buffered.
        return pl.BlockSpec(shape, lambda i: (0, 0),
                            pipeline_mode=pl.Buffered(1))

    out = pl.pallas_call(
        kernel,
        out_shape=jax.ShapeDtypeStruct((n_pad, D), out_dtype),
        grid_spec=pltpu.PrefetchScalarGridSpec(
            num_scalar_prefetch=0,
            grid=grid,
            in_specs=[
                pl.BlockSpec((row_tile, G * M), lambda i: (i, 0)),  # x tile
                const_spec((M, F2)),                                # Wr^T (f32)
                const_spec((F2, H_dim)),                            # W1 cos half
                const_spec((F2, H_dim)),                            # W1 sin half
                const_spec((1, H_dim)),                             # b1
                const_spec((G * H_dim, D)),                         # W2 block-diag
                const_spec((1, D)),                                 # b2
            ],
            out_specs=pl.BlockSpec((row_tile, D), lambda i: (i, 0)),  # [N, D]
        ),
        compiler_params=pltpu.CompilerParams(
            dimension_semantics=("parallel",),
            vmem_limit_bytes=vmem_limit,
        ),
        cost_estimate=pl.CostEstimate(
            flops=int(flops),
            transcendentals=int(transcendentals),
            bytes_accessed=int(bytes_accessed),
        ),
    )(x_flat, wr, w1c, w1s, b1_full, w2_bd, b2_full)

    return out[:N]


def init_params(key, *, G, M, F_dim, H_dim, D, gamma):
    """Synthetic parameters matching the module's shapes, stored [in, out].

    Wr:   Linear(M, F_dim//2, bias=False), weight ~ N(0, gamma^-2)
    mlp0: Linear(F_dim, H_dim) with bias
    mlp1: Linear(H_dim, D//G)  with bias
    """
    Dg = D // G
    k = jax.random.split(key, 5)
    wr = gamma ** (-2) * jax.random.normal(k[0], (F_dim // 2, M), jnp.float32)
    lim1 = 1.0 / math.sqrt(F_dim)
    w1 = jax.random.uniform(k[1], (H_dim, F_dim), jnp.float32, -lim1, lim1)
    b1 = jax.random.uniform(k[2], (H_dim,), jnp.float32, -lim1, lim1)
    lim2 = 1.0 / math.sqrt(H_dim)
    w2 = jax.random.uniform(k[3], (Dg, H_dim), jnp.float32, -lim2, lim2)
    b2 = jax.random.uniform(k[4], (Dg,), jnp.float32, -lim2, lim2)
    return (wr.T, w1.T, b1, w2.T, b2)


def _reference(x, params, *, G, M, F_dim, H_dim, D):
    # pure-JAX reference of the PyTorch forward, for sanity checking
    wr_t, w1_t, b1, w2_t, b2 = params
    N = x.shape[0]
    proj = x.reshape(N * G, M) @ wr_t
    f = (1.0 / np.sqrt(F_dim)) * jnp.concatenate(
        [jnp.cos(proj), jnp.sin(proj)], axis=-1)
    h = f @ w1_t + b1
    h = 0.5 * h * (1.0 + jax.lax.erf(h / np.sqrt(2.0)))
    y = h @ w2_t + b2
    return y.reshape(N, D)


if __name__ == "__main__":
    # Small shapes consistent with the module: x is [N, G, M].
    # N=20 exercises the cdiv/padding path and a multi-step grid.
    N, G, M = 20, 2, 4
    F_dim, H_dim, D = 32, 32, 32
    gamma = 1.0

    key = jax.random.PRNGKey(0)
    kx, kp = jax.random.split(key)
    x = jax.random.normal(kx, (N, G, M), jnp.float32)
    params = init_params(kp, G=G, M=M, F_dim=F_dim, H_dim=H_dim, D=D,
                         gamma=gamma)
    ref = _reference(x, params, G=G, M=M, F_dim=F_dim, H_dim=H_dim, D=D)

    # f32 path: exact parity with the PyTorch module (erf GELU, f32 matmuls).
    pex = learnable_fourier_pos_encoding(
        x, params, G=G, M=M, F_dim=F_dim, H_dim=H_dim, D=D)
    pex = jax.block_until_ready(pex)
    np.testing.assert_allclose(np.asarray(pex), np.asarray(ref),
                               rtol=1e-5, atol=1e-5)

    # Selective-bf16 path: Wr projection stays f32, post-trig matmuls in bf16
    # with f32 accumulation (the v5e/v6e recommendation).
    pex_bf16 = learnable_fourier_pos_encoding(
        x, params, G=G, M=M, F_dim=F_dim, H_dim=H_dim, D=D,
        use_bf16_matmul=True, row_tile=8)
    pex_bf16 = jax.block_until_ready(pex_bf16)
    np.testing.assert_allclose(np.asarray(pex_bf16), np.asarray(ref),
                               rtol=5e-2, atol=5e-2)

    print("KERNEL_OK")
</pallas_src>

<mosaic_0001>
module attributes {stable_mosaic.version = 11 : i64} {
  func.func @_lfpe_kernel(%arg0: i32, %arg1: memref<16x8xf32, #tpu.memory_space<vmem>>, %arg2: memref<4x16xf32, #tpu.memory_space<vmem>>, %arg3: memref<16x32xf32, #tpu.memory_space<vmem>>, %arg4: memref<16x32xf32, #tpu.memory_space<vmem>>, %arg5: memref<1x32xf32, #tpu.memory_space<vmem>>, %arg6: memref<64x32xf32, #tpu.memory_space<vmem>>, %arg7: memref<1x32xf32, #tpu.memory_space<vmem>>, %arg8: memref<16x32xf32, #tpu.memory_space<vmem>>) attributes {dimension_semantics = [#tpu.dimension_semantics<parallel>], iteration_bounds = array<i64: 2>, scalar_prefetch = 0 : i64, scratch_operands = 0 : i64, tpu.core_type = #tpu.core_type<tc>, window_params = [{transform_indices = @transform_0, window_bounds = array<i64: 16, 8>}, {pipeline_mode = #tpu.pipeline_mode<synchronous>, transform_indices = @transform_1, window_bounds = array<i64: 4, 16>}, {pipeline_mode = #tpu.pipeline_mode<synchronous>, transform_indices = @transform_2, window_bounds = array<i64: 16, 32>}, {pipeline_mode = #tpu.pipeline_mode<synchronous>, transform_indices = @transform_3, window_bounds = array<i64: 16, 32>}, {pipeline_mode = #tpu.pipeline_mode<synchronous>, transform_indices = @transform_4, window_bounds = array<i64: 1, 32>}, {pipeline_mode = #tpu.pipeline_mode<synchronous>, transform_indices = @transform_5, window_bounds = array<i64: 64, 32>}, {pipeline_mode = #tpu.pipeline_mode<synchronous>, transform_indices = @transform_6, window_bounds = array<i64: 1, 32>}, {transform_indices = @transform_7, window_bounds = array<i64: 16, 32>}]} {
    %c0 = arith.constant 0 : index
    %c0_0 = arith.constant 0 : index
    %0 = vector.load %arg1[%c0, %c0_0] : memref<16x8xf32, #tpu.memory_space<vmem>>, vector<16x4xf32>
    %c0_1 = arith.constant 0 : index
    %c0_2 = arith.constant 0 : index
    %1 = vector.load %arg2[%c0_1, %c0_2] : memref<4x16xf32, #tpu.memory_space<vmem>>, vector<4x16xf32>
    %cst = arith.constant dense<0.000000e+00> : vector<16x16xf32>
    %2 = tpu.matmul %0, %1, %cst {dimension_numbers = #tpu.dot_dimension_numbers<[1], [0], [0], [1], [0, 0, 1, 1], [], []>} : vector<16x4xf32>, vector<4x16xf32>, vector<16x16xf32> -> vector<16x16xf32>
    %3 = math.cos %2 : vector<16x16xf32>
    %4 = math.sin %2 : vector<16x16xf32>
    %c0_3 = arith.constant 0 : index
    %c0_4 = arith.constant 0 : index
    %5 = vector.load %arg3[%c0_3, %c0_4] : memref<16x32xf32, #tpu.memory_space<vmem>>, vector<16x32xf32>
    %cst_5 = arith.constant dense<0.000000e+00> : vector<16x32xf32>
    %6 = tpu.matmul %3, %5, %cst_5 {dimension_numbers = #tpu.dot_dimension_numbers<[1], [0], [0], [1], [0, 0, 1, 1], [], []>} : vector<16x16xf32>, vector<16x32xf32>, vector<16x32xf32> -> vector<16x32xf32>
    %c0_6 = arith.constant 0 : index
    %c0_7 = arith.constant 0 : index
    %7 = vector.load %arg4[%c0_6, %c0_7] : memref<16x32xf32, #tpu.memory_space<vmem>>, vector<16x32xf32>
    %cst_8 = arith.constant dense<0.000000e+00> : vector<16x32xf32>
    %8 = tpu.matmul %4, %7, %cst_8 {dimension_numbers = #tpu.dot_dimension_numbers<[1], [0], [0], [1], [0, 0, 1, 1], [], []>} : vector<16x16xf32>, vector<16x32xf32>, vector<16x32xf32> -> vector<16x32xf32>
    %9 = arith.addf %6, %8 : vector<16x32xf32>
    %c0_9 = arith.constant 0 : index
    %c0_10 = arith.constant 0 : index
    %10 = vector.load %arg5[%c0_9, %c0_10] : memref<1x32xf32, #tpu.memory_space<vmem>>, vector<1x32xf32>
    %11 = vector.broadcast %10 : vector<1x32xf32> to vector<16x32xf32>
    %12 = arith.addf %9, %11 : vector<16x32xf32>
    %cst_11 = arith.constant 5.000000e-01 : f32
    %13 = vector.broadcast %cst_11 : f32 to vector<16x32xf32>
    %14 = arith.mulf %13, %12 : vector<16x32xf32>
    %cst_12 = arith.constant 0.707106769 : f32
    %15 = vector.broadcast %cst_12 : f32 to vector<16x32xf32>
    %16 = arith.mulf %12, %15 : vector<16x32xf32>
    %17 = math.erf %16 : vector<16x32xf32>
    %cst_13 = arith.constant 1.000000e+00 : f32
    %18 = vector.broadcast %cst_13 : f32 to vector<16x32xf32>
    %19 = arith.addf %18, %17 : vector<16x32xf32>
    %20 = arith.mulf %14, %19 : vector<16x32xf32>
    %c0_14 = arith.constant 0 : index
    %c4 = arith.constant 4 : index
    %21 = vector.load %arg1[%c0_14, %c4] : memref<16x8xf32, #tpu.memory_space<vmem>>, vector<16x4xf32>
    %c0_15 = arith.constant 0 : index
    %c0_16 = arith.constant 0 : index
    %22 = vector.load %arg2[%c0_15, %c0_16] : memref<4x16xf32, #tpu.memory_space<vmem>>, vector<4x16xf32>
    %cst_17 = arith.constant dense<0.000000e+00> : vector<16x16xf32>
    %23 = tpu.matmul %21, %22, %cst_17 {dimension_numbers = #tpu.dot_dimension_numbers<[1], [0], [0], [1], [0, 0, 1, 1], [], []>} : vector<16x4xf32>, vector<4x16xf32>, vector<16x16xf32> -> vector<16x16xf32>
    %24 = math.cos %23 : vector<16x16xf32>
    %25 = math.sin %23 : vector<16x16xf32>
    %c0_18 = arith.constant 0 : index
    %c0_19 = arith.constant 0 : index
    %26 = vector.load %arg3[%c0_18, %c0_19] : memref<16x32xf32, #tpu.memory_space<vmem>>, vector<16x32xf32>
    %cst_20 = arith.constant dense<0.000000e+00> : vector<16x32xf32>
    %27 = tpu.matmul %24, %26, %cst_20 {dimension_numbers = #tpu.dot_dimension_numbers<[1], [0], [0], [1], [0, 0, 1, 1], [], []>} : vector<16x16xf32>, vector<16x32xf32>, vector<16x32xf32> -> vector<16x32xf32>
    %c0_21 = arith.constant 0 : index
    %c0_22 = arith.constant 0 : index
    %28 = vector.load %arg4[%c0_21, %c0_22] : memref<16x32xf32, #tpu.memory_space<vmem>>, vector<16x32xf32>
    %cst_23 = arith.constant dense<0.000000e+00> : vector<16x32xf32>
    %29 = tpu.matmul %25, %28, %cst_23 {dimension_numbers = #tpu.dot_dimension_numbers<[1], [0], [0], [1], [0, 0, 1, 1], [], []>} : vector<16x16xf32>, vector<16x32xf32>, vector<16x32xf32> -> vector<16x32xf32>
    %30 = arith.addf %27, %29 : vector<16x32xf32>
    %c0_24 = arith.constant 0 : index
    %c0_25 = arith.constant 0 : index
    %31 = vector.load %arg5[%c0_24, %c0_25] : memref<1x32xf32, #tpu.memory_space<vmem>>, vector<1x32xf32>
    %32 = vector.broadcast %31 : vector<1x32xf32> to vector<16x32xf32>
    %33 = arith.addf %30, %32 : vector<16x32xf32>
    %cst_26 = arith.constant 5.000000e-01 : f32
    %34 = vector.broadcast %cst_26 : f32 to vector<16x32xf32>
    %35 = arith.mulf %34, %33 : vector<16x32xf32>
    %cst_27 = arith.constant 0.707106769 : f32
    %36 = vector.broadcast %cst_27 : f32 to vector<16x32xf32>
    %37 = arith.mulf %33, %36 : vector<16x32xf32>
    %38 = math.erf %37 : vector<16x32xf32>
    %cst_28 = arith.constant 1.000000e+00 : f32
    %39 = vector.broadcast %cst_28 : f32 to vector<16x32xf32>
    %40 = arith.addf %39, %38 : vector<16x32xf32>
    %41 = arith.mulf %35, %40 : vector<16x32xf32>
    %42 = tpu.concatenate %20, %41 in 1 : vector<16x32xf32>, vector<16x32xf32> -> vector<16x64xf32>
    %c0_29 = arith.constant 0 : index
    %c0_30 = arith.constant 0 : index
    %43 = vector.load %arg6[%c0_29, %c0_30] : memref<64x32xf32, #tpu.memory_space<vmem>>, vector<64x32xf32>
    %cst_31 = arith.constant dense<0.000000e+00> : vector<16x32xf32>
    %44 = tpu.matmul %42, %43, %cst_31 {dimension_numbers = #tpu.dot_dimension_numbers<[1], [0], [0], [1], [0, 0, 1, 1], [], []>} : vector<16x64xf32>, vector<64x32xf32>, vector<16x32xf32> -> vector<16x32xf32>
    %c0_32 = arith.constant 0 : index
    %c0_33 = arith.constant 0 : index
    %45 = vector.load %arg7[%c0_32, %c0_33] : memref<1x32xf32, #tpu.memory_space<vmem>>, vector<1x32xf32>
    %46 = vector.broadcast %45 : vector<1x32xf32> to vector<16x32xf32>
    %47 = arith.addf %44, %46 : vector<16x32xf32>
    %c0_34 = arith.constant 0 : index
    %c0_35 = arith.constant 0 : index
    %48 = vector.load %arg8[%c0_34, %c0_35] : memref<16x32xf32, #tpu.memory_space<vmem>>, vector<16x32xf32>
    tpu.vector_store %arg8[%c0_34, %c0_35], %47 {strides = array<i32>} : memref<16x32xf32, #tpu.memory_space<vmem>>, vector<16x32xf32>,
    return
  }
  func.func @transform_0(%arg0: i32) -> (i32, i32) {
    %c0_i32 = arith.constant 0 : i32
    %c0_i32_0 = arith.constant 0 : i32
    return %arg0, %c0_i32 : i32, i32
  }
  func.func @transform_1(%arg0: i32) -> (i32, i32) {
    %c0_i32 = arith.constant 0 : i32
    %c0_i32_0 = arith.constant 0 : i32
    %c0_i32_1 = arith.constant 0 : i32
    return %c0_i32, %c0_i32_0 : i32, i32
  }
  func.func @transform_2(%arg0: i32) -> (i32, i32) {
    %c0_i32 = arith.constant 0 : i32
    %c0_i32_0 = arith.constant 0 : i32
    %c0_i32_1 = arith.constant 0 : i32
    return %c0_i32, %c0_i32_0 : i32, i32
  }
  func.func @transform_3(%arg0: i32) -> (i32, i32) {
    %c0_i32 = arith.constant 0 : i32
    %c0_i32_0 = arith.constant 0 : i32
    %c0_i32_1 = arith.constant 0 : i32
    return %c0_i32, %c0_i32_0 : i32, i32
  }
  func.func @transform_4(%arg0: i32) -> (i32, i32) {
    %c0_i32 = arith.constant 0 : i32
    %c0_i32_0 = arith.constant 0 : i32
    %c0_i32_1 = arith.constant 0 : i32
    return %c0_i32, %c0_i32_0 : i32, i32
  }
  func.func @transform_5(%arg0: i32) -> (i32, i32) {
    %c0_i32 = arith.constant 0 : i32
    %c0_i32_0 = arith.constant 0 : i32
    %c0_i32_1 = arith.constant 0 : i32
    return %c0_i32, %c0_i32_0 : i32, i32
  }
  func.func @transform_6(%arg0: i32) -> (i32, i32) {
    %c0_i32 = arith.constant 0 : i32
    %c0_i32_0 = arith.constant 0 : i32
    %c0_i32_1 = arith.constant 0 : i32
    return %c0_i32, %c0_i32_0 : i32, i32
  }
  func.func @transform_7(%arg0: i32) -> (i32, i32) {
    %c0_i32 = arith.constant 0 : i32
    %c0_i32_0 = arith.constant 0 : i32
    return %arg0, %c0_i32 : i32, i32
  }
}

</mosaic_0001>

<llo_original>
// kernel: tpu_custom_call.1
$region0: #{tpu_custom_call.1}
  #allocation0 [shape = 'u32[]', space=smem, size = 0x4, offset = 0x4, fixed_abs, tag = 'smem constant byte address 0x4 - core index']
  #allocation1 [shape = 'u32[144,128]{1,0:T(1,128)}', space=vmem, size = 0x12000, scoped, tag = 'internal scratch']
  %s0 = inlined_call_operand.vmem [shape: f32[32,8], index: 0, kind: input, shape index: {}]
  %s1 = inlined_call_operand.vmem [shape: f32[4,16], index: 1, kind: input, shape index: {}]
  %s2 = inlined_call_operand.vmem [shape: f32[16,32], index: 2, kind: input, shape index: {}]
  %s3 = inlined_call_operand.vmem [shape: f32[16,32], index: 3, kind: input, shape index: {}]
  %s4 = inlined_call_operand.vmem [shape: f32[1,32], index: 4, kind: input, shape index: {}]
  %s5 = inlined_call_operand.vmem [shape: f32[64,32], index: 5, kind: input, shape index: {}]
  %s6 = inlined_call_operand.vmem [shape: f32[1,32], index: 6, kind: input, shape index: {}]
  %s7 = inlined_call_operand.hbm [shape: f32[32,32], index: 7, kind: output, shape index: {}]
  %s8 = sld [smem:[#allocation0]]
  $region61: #{tpu_custom_call.1} parent=0
    _
  %s10 = ssub.s32 1, %s8
  %s11 = scalar_select 0, %s10, %s8
  $region1: #{tpu_custom_call.1} parent=0
    #allocation2 [shape = 'u8[16384]{0}', space=vmem, size = 0x4000, scoped, tag = 'output window, operand 0']
    #allocation3 [shape = 's32[2]{0}', space=sflag, size = 0x8, scoped, tag = 'scoped memory for tpu_custom_call.1']
    %12 = vsyncpa [#allocation3], 0
    %s13 = scalar_lea.sflag [#allocation3], 1
    %14 = vsyncpa %s13, 0
    loop: start=0, step=1, limit=4
    $region2: #{tpu_custom_call.1} parent=1 // loop_pre_header
      _
    $region3: #{tpu_custom_call.1} parent=1 // loop_header
      %s16 = sphi 0, %s20
      %p17 = scmp.ge.s32.totalorder %s16, 4
      %s26 = sphi 0, %s28
      %s29 = sphi 0, %s26
      %s30 = sphi 0, %s29
      %s46 = sphi 0, %s30
      %s50 = sphi 0, %s50
      %s52 = sphi 0, %s50
      %s53 = sphi 0, %s52
      %s67 = sphi 0, %s53
      %s71 = sphi 0, %s71
      %s73 = sphi 0, %s71
      %s74 = sphi 0, %s73
      %s88 = sphi 0, %s74
      %s92 = sphi 0, %s92
      %s94 = sphi 0, %s92
      %s95 = sphi 0, %s94
      %s109 = sphi 0, %s95
      %s113 = sphi 0, %s113
      %s115 = sphi 0, %s113
      %s116 = sphi 0, %s115
      %s130 = sphi 0, %s116
      %s134 = sphi 0, %s134
      %s136 = sphi 0, %s134
      %s137 = sphi 0, %s136
      %s151 = sphi 0, %s137
      %s155 = sphi 0, %s155
      %s157 = sphi 0, %s155
      %s158 = sphi 0, %s157
      %s172 = sphi 0, %s158
      %s178 = sphi 0, %s180
      %s181 = sphi 0, %s178
      %s182 = sphi 0, %s181
      %s198 = sphi 0, %s182
    $region4: #{tpu_custom_call.1} parent=1 // loop_header_branch
      %19 = sbr.rel (%p17) target = $region8
    $region5: #{tpu_custom_call.1} parent=1 // loop_body
      %s21 = ssub.s32 %s16, 1
      %s22 = ssub.s32 %s16, 2
      %s23 = sadd.s32 %s16, 1
      %s24 = ssub.s32 %s16, %s23
      %p25 = scmp.eq.s32.totalorder %s24, 0
      %s27 = sadd.s32 %s26, 1
      %s28 = scalar_select %p25, %s26, %s27
      %p31 = pneg %p25
      %p32 = scmp.eq.s32.totalorder %s16, 1
      %p33 = por %p31, %p32
      %p34 = scmp.ne.s32.totalorder %s26, %s29
      %p35 = scmp.eq.s32.totalorder %s16, 0
      %p36 = por %p34, %p35
      %p37 = scmp.ne.s32.totalorder %s26, %s29
      %p38 = scmp.eq.s32.totalorder %s21, 1
      %p39 = por %p37, %p38
      %p40 = scmp.ne.s32.totalorder %s29, %s30
      %p41 = scmp.eq.s32.totalorder %s21, 0
      %p42 = por %p40, %p41
      %p43 = scmp.ne.s32.totalorder %s29, %s30
      %p44 = scmp.eq.s32.totalorder %s22, 1
      %p45 = por %p43, %p44
      %p47 = scmp.ne.s32.totalorder %s30, %s46
      %p48 = scmp.eq.s32.totalorder %s22, 0
      %p49 = por %p47, %p48
      %s51 = sadd.s32 %s50, 1
      %p54 = scmp.eq.s32.totalorder %s16, 1
      %p55 = scmp.ne.s32.totalorder %s50, %s52
      %p56 = scmp.eq.s32.totalorder %s16, 0
      %p57 = por %p55, %p56
      %p58 = scmp.ne.s32.totalorder %s50, %s52
      %p59 = scmp.eq.s32.totalorder %s21, 1
      %p60 = por %p58, %p59
      %p61 = scmp.ne.s32.totalorder %s52, %s53
      %p62 = scmp.eq.s32.totalorder %s21, 0
      %p63 = por %p61, %p62
      %p64 = scmp.ne.s32.totalorder %s52, %s53
      %p65 = scmp.eq.s32.totalorder %s22, 1
      %p66 = por %p64, %p65
      %p68 = scmp.ne.s32.totalorder %s53, %s67
      %p69 = scmp.eq.s32.totalorder %s22, 0
      %p70 = por %p68, %p69
      %s72 = sadd.s32 %s71, 1
      %p75 = scmp.eq.s32.totalorder %s16, 1
      %p76 = scmp.ne.s32.totalorder %s71, %s73
      %p77 = scmp.eq.s32.totalorder %s16, 0
      %p78 = por %p76, %p77
      %p79 = scmp.ne.s32.totalorder %s71, %s73
      %p80 = scmp.eq.s32.totalorder %s21, 1
      %p81 = por %p79, %p80
      %p82 = scmp.ne.s32.totalorder %s73, %s74
      %p83 = scmp.eq.s32.totalorder %s21, 0
      %p84 = por %p82, %p83
      %p85 = scmp.ne.s32.totalorder %s73, %s74
      %p86 = scmp.eq.s32.totalorder %s22, 1
      %p87 = por %p85, %p86
      %p89 = scmp.ne.s32.totalorder %s74, %s88
      %p90 = scmp.eq.s32.totalorder %s22, 0
      %p91 = por %p89, %p90
      %s93 = sadd.s32 %s92, 1
      %p96 = scmp.eq.s32.totalorder %s16, 1
      %p97 = scmp.ne.s32.totalorder %s92, %s94
      %p98 = scmp.eq.s32.totalorder %s16, 0
      %p99 = por %p97, %p98
      %p100 = scmp.ne.s32.totalorder %s92, %s94
      %p101 = scmp.eq.s32.totalorder %s21, 1
      %p102 = por %p100, %p101
      %p103 = scmp.ne.s32.totalorder %s94, %s95
      %p104 = scmp.eq.s32.totalorder %s21, 0
      %p105 = por %p103, %p104
      %p106 = scmp.ne.s32.totalorder %s94, %s95
      %p107 = scmp.eq.s32.totalorder %s22, 1
      %p108 = por %p106, %p107
      %p110 = scmp.ne.s32.totalorder %s95, %s109
      %p111 = scmp.eq.s32.totalorder %s22, 0
      %p112 = por %p110, %p111
      %s114 = sadd.s32 %s113, 1
      %p117 = scmp.eq.s32.totalorder %s16, 1
      %p118 = scmp.ne.s32.totalorder %s113, %s115
      %p119 = scmp.eq.s32.totalorder %s16, 0
      %p120 = por %p118, %p119
      %p121 = scmp.ne.s32.totalorder %s113, %s115
      %p122 = scmp.eq.s32.totalorder %s21, 1
      %p123 = por %p121, %p122
      %p124 = scmp.ne.s32.totalorder %s115, %s116
      %p125 = scmp.eq.s32.totalorder %s21, 0
      %p126 = por %p124, %p125
      %p127 = scmp.ne.s32.totalorder %s115, %s116
      %p128 = scmp.eq.s32.totalorder %s22, 1
      %p129 = por %p127, %p128
      %p131 = scmp.ne.s32.totalorder %s116, %s130
      %p132 = scmp.eq.s32.totalorder %s22, 0
      %p133 = por %p131, %p132
      %s135 = sadd.s32 %s134, 1
      %p138 = scmp.eq.s32.totalorder %s16, 1
      %p139 = scmp.ne.s32.totalorder %s134, %s136
      %p140 = scmp.eq.s32.totalorder %s16, 0
      %p141 = por %p139, %p140
      %p142 = scmp.ne.s32.totalorder %s134, %s136
      %p143 = scmp.eq.s32.totalorder %s21, 1
      %p144 = por %p142, %p143
      %p145 = scmp.ne.s32.totalorder %s136, %s137
      %p146 = scmp.eq.s32.totalorder %s21, 0
      %p147 = por %p145, %p146
      %p148 = scmp.ne.s32.totalorder %s136, %s137
      %p149 = scmp.eq.s32.totalorder %s22, 1
      %p150 = por %p148, %p149
      %p152 = scmp.ne.s32.totalorder %s137, %s151
      %p153 = scmp.eq.s32.totalorder %s22, 0
      %p154 = por %p152, %p153
      %s156 = sadd.s32 %s155, 1
      %p159 = scmp.eq.s32.totalorder %s16, 1
      %p160 = scmp.ne.s32.totalorder %s155, %s157
      %p161 = scmp.eq.s32.totalorder %s16, 0
      %p162 = por %p160, %p161
      %p163 = scmp.ne.s32.totalorder %s155, %s157
      %p164 = scmp.eq.s32.totalorder %s21, 1
      %p165 = por %p163, %p164
      %p166 = scmp.ne.s32.totalorder %s157, %s158
      %p167 = scmp.eq.s32.totalorder %s21, 0
      %p168 = por %p166, %p167
      %p169 = scmp.ne.s32.totalorder %s157, %s158
      %p170 = scmp.eq.s32.totalorder %s22, 1
      %p171 = por %p169, %p170
      %p173 = scmp.ne.s32.totalorder %s158, %s172
      %p174 = scmp.eq.s32.totalorder %s22, 0
      %p175 = por %p173, %p174
      %s176 = ssub.s32 %s16, %s23
      %p177 = scmp.eq.s32.totalorder %s176, 0
      %s179 = sadd.s32 %s178, 1
      %s180 = scalar_select %p177, %s178, %s179
      %p183 = pneg %p177
      %p184 = scmp.eq.s32.totalorder %s16, 1
      %p185 = por %p183, %p184
      %p186 = scmp.ne.s32.totalorder %s178, %s181
      %p187 = scmp.eq.s32.totalorder %s16, 0
      %p188 = por %p186, %p187
      %p189 = scmp.ne.s32.totalorder %s178, %s181
      %p190 = scmp.eq.s32.totalorder %s21, 1
      %p191 = por %p189, %p190
      %p192 = scmp.ne.s32.totalorder %s181, %s182
      %p193 = scmp.eq.s32.totalorder %s21, 0
      %p194 = por %p192, %p193
      %p195 = scmp.ne.s32.totalorder %s181, %s182
      %p196 = scmp.eq.s32.totalorder %s22, 1
      %p197 = por %p195, %p196
      %p199 = scmp.ne.s32.totalorder %s182, %s198
      %p200 = scmp.eq.s32.totalorder %s22, 0
      %p201 = por %p199, %p200
      %p202 = scmp.le.s32.totalorder 1, %s16
      %p203 = scmp.lt.s32.totalorder %s16, 3
      %p204 = pnand %p202, %p203
      %p205 = pneg %p204
      // Predicated region
      $region9: #{tpu_custom_call.1} parent=5 // pred_check
        _
      $region10: #{tpu_custom_call.1} parent=5 // pred_check_branch
        %207 = sbr.rel (%p204) target = $region12
      $region11: #{tpu_custom_call.1} parent=5 // pred_region
        %s208 = ssub.s32 %s16, 1
        // Predicated region
        $region13: #{tpu_custom_call.1} parent=11 // pred_check
          %p209 = pneg %p63
        $region14: #{tpu_custom_call.1} parent=11 // pred_check_branch
          %211 = sbr.rel (%p209) target = $region16
        $region15: #{tpu_custom_call.1} parent=11 // pred_region
          _
        $region16: #{tpu_custom_call.1} parent=11 // pred_fallthru
          _
        // Predicated region
        $region17: #{tpu_custom_call.1} parent=11 // pred_check
          %p212 = pneg %p84
        $region18: #{tpu_custom_call.1} parent=11 // pred_check_branch
          %214 = sbr.rel (%p212) target = $region20
        $region19: #{tpu_custom_call.1} parent=11 // pred_region
          _
        $region20: #{tpu_custom_call.1} parent=11 // pred_fallthru
          _
        // Predicated region
        $region21: #{tpu_custom_call.1} parent=11 // pred_check
          %p215 = pneg %p105
        $region22: #{tpu_custom_call.1} parent=11 // pred_check_branch
          %217 = sbr.rel (%p215) target = $region24
        $region23: #{tpu_custom_call.1} parent=11 // pred_region
          _
        $region24: #{tpu_custom_call.1} parent=11 // pred_fallthru
          _
        // Predicated region
        $region25: #{tpu_custom_call.1} parent=11 // pred_check
          %p218 = pneg %p126
        $region26: #{tpu_custom_call.1} parent=11 // pred_check_branch
          %220 = sbr.rel (%p218) target = $region28
        $region27: #{tpu_custom_call.1} parent=11 // pred_region
          _
        $region28: #{tpu_custom_call.1} parent=11 // pred_fallthru
          _
        // Predicated region
        $region29: #{tpu_custom_call.1} parent=11 // pred_check
          %p221 = pneg %p147
        $region30: #{tpu_custom_call.1} parent=11 // pred_check_branch
          %223 = sbr.rel (%p221) target = $region32
        $region31: #{tpu_custom_call.1} parent=11 // pred_region
          _
        $region32: #{tpu_custom_call.1} parent=11 // pred_fallthru
          _
        // Predicated region
        $region33: #{tpu_custom_call.1} parent=11 // pred_check
          %p224 = pneg %p168
        $region34: #{tpu_custom_call.1} parent=11 // pred_check_branch
          %226 = sbr.rel (%p224) target = $region36
        $region35: #{tpu_custom_call.1} parent=11 // pred_region
          _
        $region36: #{tpu_custom_call.1} parent=11 // pred_fallthru
          _
      $region12: #{tpu_custom_call.1} parent=5 // pred_fallthru
        _
      %p227 = scmp.lt.s32.totalorder %s16, 2
      // Predicated region
      $region37: #{tpu_custom_call.1} parent=5 // pred_check
        %p228 = pneg %p227
      $region38: #{tpu_custom_call.1} parent=5 // pred_check_branch
        %230 = sbr.rel (%p228) target = $region40
      $region39: #{tpu_custom_call.1} parent=5 // pred_region
        // Predicated region
        $region41: #{tpu_custom_call.1} parent=39 // pred_check
          %p231 = pneg %p36
        $region42: #{tpu_custom_call.1} parent=39 // pred_check_branch
          %233 = sbr.rel (%p231) target = $region44
        $region43: #{tpu_custom_call.1} parent=39 // pred_region
          %s234 = smul.u32 2, %s16
          %p235 = scmp.lt.s32.totalorder %s234, 3
          %s236 = scalar_select %p235, %s234, 3
          %s237 = smul.addr %s236, 8
          %s238 = scalar_lea.vmem %s0, %s237
          %s239 = smul.u32 2, %s16
        $region44: #{tpu_custom_call.1} parent=39 // pred_fallthru
          _
      $region40: #{tpu_custom_call.1} parent=5 // pred_fallthru
        _
      %p240 = scmp.le.s32.totalorder 1, %s16
      %p241 = scmp.lt.s32.totalorder %s16, 3
      %p242 = pnand %p240, %p241
      %p243 = pneg %p242
      // Predicated region
      $region45: #{tpu_custom_call.1} parent=5 // pred_check
        _
      $region46: #{tpu_custom_call.1} parent=5 // pred_check_branch
        %245 = sbr.rel (%p242) target = $region48
      $region47: #{tpu_custom_call.1} parent=5 // pred_region
        %s246 = ssub.s32 %s16, 1
        %s247 = smul.u32 2, %s21
        %p248 = scmp.lt.s32.totalorder %s247, 3
        %s249 = scalar_select %p248, %s247, 3
        %s250 = smul.addr %s249, 8
        %s251 = scalar_lea.vmem %s0, %s250
        %p252 = pneg %p42
        %p253 = pneg %p39
        %p254 = pneg %p63
        %p255 = pneg %p60
        %p256 = pneg %p84
        %p257 = pneg %p81
        %p258 = pneg %p105
        %p259 = pneg %p102
        %p260 = pneg %p126
        %p261 = pneg %p123
        %p262 = pneg %p147
        %p263 = pneg %p144
        %p264 = pneg %p168
        %p265 = pneg %p165
        %p266 = pneg %p194
        %p267 = pneg %p191
        %s268 = sand.u32 %s181, 1
        %s269 = scalar_lea.sflag [#allocation3], %s268
        %s270 = sand.u32 %s181, 1
        %s271 = smul.addr %s270, 16
        %s272 = scalar_lea.vmem [#allocation2], %s271
        %s273 = smul.u32 2, %s21
        %p274 = scmp.lt.s32.totalorder %s273, 3
        %s275 = scalar_select %p274, %s273, 3
        %s276 = smul.addr %s275, 8
        %s277 = scalar_lea.vmem %s0, %s276
        %s278 = smul.u32 2, %s21
        %s279 = smul.u32 2, %s21
        %v280 = vld [vmem:[%s277] sm:$0xff]
        %v281 = vld [vmem:[%s277 + $0x8] sm:$0xff]
        %v282 = vld [vmem:[%s1] sm:$0xf]
        %vm283 = vcmask 31744
        %v285 = vsel %vm283, %v280, 0
        %v288 = vsel %vm283, %v281, 0
        %vm290 = vcmask 1043456
        %v292 = vsel %vm290, %v282, 0
        %294 = vmatprep.subr.mxu0 0.0
        %295 = vmatpush1.msra.mxu0 %v292
        %296 = vmatprep.subr.mxu0 0.0
        %297 = vmatpush1.msra.mxu0 0.0
        %298 = vmatprep.subr.mxu0 0.0
        %299 = vmatpush1.msra.mxu0 0.0
        %300 = vmatprep.subr.mxu0 0.0
        %301 = vmatpush1.msra.mxu0 0.0
        %302 = vmatprep.subr.mxu0 0.0
        %303 = vmatpush1.msra.mxu0 0.0
        %304 = vmatprep.subr.mxu0 0.0
        %305 = vmatpush1.msra.mxu0 0.0
        %306 = vmatprep.subr.mxu0 0.0
        %307 = vmatpush1.msra.mxu0 0.0
        %308 = vmatprep.subr.mxu0 0.0
        %309 = vmatpush1.msra.mxu0 0.0
        %310 = vmatprep.subr.mxu0 0.0
        %311 = vmatpush1.msra.mxu0 0.0
        %312 = vmatprep.subr.mxu0 0.0
        %313 = vmatpush1.msra.mxu0 0.0
        %314 = vmatprep.subr.mxu0 0.0
        %315 = vmatpush1.msra.mxu0 0.0
        %316 = vmatprep.subr.mxu0 0.0
        %317 = vmatpush1.msra.mxu0 0.0
        %318 = vmatprep.subr.mxu0 0.0
        %319 = vmatpush1.msra.mxu0 0.0
        %320 = vmatprep.subr.mxu0 0.0
        %321 = vmatpush1.msra.mxu0 0.0
        %322 = vmatprep.subr.mxu0 0.0
        %323 = vmatpush1.msra.mxu0 0.0
        %324 = vmatprep.subr.mxu0 0.0
        %325 = vmatpush1.msra.mxu0 0.0
        %326 = vmatprep.subr.mxu0 0.0
        %327 = vmatpush1.msra.mxu0 0.0
        %328 = vmatprep.subr.mxu0 0.0
        %329 = vmatpush1.msra.mxu0 0.0
        %330 = vmatprep.subr.mxu0 0.0
        %331 = vmatpush1.msra.mxu0 0.0
        %332 = vmatprep.subr.mxu0 0.0
        %333 = vmatpush1.msra.mxu0 0.0
        %334 = vmatprep.subr.mxu0 0.0
        %335 = vmatpush1.msra.mxu0 0.0
        %336 = vmatprep.subr.mxu0 0.0
        %337 = vmatpush1.msra.mxu0 0.0
        %338 = vmatprep.subr.mxu0 0.0
        %339 = vmatpush1.msra.mxu0 0.0
        %340 = vmatprep.subr.mxu0 0.0
        %341 = vmatpush1.msra.mxu0 0.0
        %342 = vmatprep.subr.mxu0 0.0
        %343 = vmatpush1.msra.mxu0 0.0
        %344 = vmatprep.subr.mxu0 0.0
        %345 = vmatpush1.msra.mxu0 0.0
        %346 = vmatprep.subr.mxu0 0.0
        %347 = vmatpush1.msra.mxu0 0.0
        %348 = vmatprep.subr.mxu0 0.0
        %349 = vmatpush1.msra.mxu0 0.0
        %350 = vmatprep.subr.mxu0 0.0
        %351 = vmatpush1.msra.mxu0 0.0
        %352 = vmatprep.subr.mxu0 0.0
        %353 = vmatpush1.msra.mxu0 0.0
        %354 = vmatprep.subr.mxu0 0.0
        %355 = vmatpush1.msra.mxu0 0.0
        %356 = vmatprep.subr.mxu0 0.0
        %357 = vmatpush1.msra.mxu0 0.0
        %358 = vmatprep.mubr.f32.mxu0 0.0
        %359 = vmatmul.mubr.f32.gmra.mrb[0].mxu0 %v285
        %v360 = vpop.f32.mrb[0].mxu0
        %v361 = vadd.f32 0.0, %v360
        %v362 = vpop.f32.mrb[0].mxu0
        %363 = vmatprep.mubr.f32.mxu0 0.0
        %364 = vmatmul.mubr.f32.gmra.mrb[0].mxu0 %v288
        %v365 = vpop.f32.mrb[0].mxu0
        %v366 = vadd.f32 0.0, %v365
        %v367 = vpop.f32.mrb[0].mxu0
        %368 = vdwg.mxu0
        %v369 = vand.u32 2147483647, %v361
        %vm370 = vcmp.le.f32.partialorder %v369, 0.7853982
        %vm371 = vcmp.lt.s32.totalorder %v361, 0
        %v372 = vand.u32 %v361, 2139095040
        %v373 = vshrl.u32 %v372, 23
        %v374 = vsub.s32 %v373, 127
        %v375 = vand.u32 2147483647, %v361
        %v376 = vand.u32 %v375, 8388607
        %v377 = vor.u32 %v376, 8388608
        %v378 = vsub.s32 0, %v377
        %v379 = vadd.s32 %v374, 1
        %vm380 = vcmp.gt.s32.totalorder %v379, 0
        %v381 = vsel %vm380, %v379, 0
        %v382 = vshrl.u32 %v381, 5
        %v383 = vand.u32 %v381, 31
        %v384 = vsub.s32 32, %v383
        %v385 = vshrl.u32 683565275, %v384
        %v386 = vshll.u32 683565275, %v383
        %v387 = vshrl.u32 2475754826, %v384
        %v388 = vor.u32 %v386, %v387
        %v389 = vshll.u32 2475754826, %v383
        %v390 = vshrl.u32 2131351028, %v384
        %v391 = vor.u32 %v389, %v390
        %v392 = vshll.u32 2131351028, %v383
        %v393 = vshrl.u32 2102212464, %v384
        %v394 = vor.u32 %v392, %v393
        %v395 = vshll.u32 2102212464, %v383
        %v396 = vshrl.u32 920167782, %v384
        %v397 = vor.u32 %v395, %v396
        %v398 = vshll.u32 920167782, %v383
        %v399 = vshrl.u32 1326507024, %v384
        %v400 = vor.u32 %v398, %v399
        %vm401 = vcmp.lt.s32.totalorder %v382, 1
        %vm402 = vcmp.lt.s32.totalorder %v382, 2
        %vm403 = vcmp.lt.s32.totalorder %v382, 3
        %vm404 = vcmp.lt.s32.totalorder %v382, 4
        %v405 = vsel %vm401, %v385, %v388
        %v406 = vsel %vm404, %v394, 2102212464
        %v407 = vsel %vm403, %v391, %v406
        %v408 = vsel %vm402, %v405, %v407
        %v409 = vsel %vm401, %v388, %v391
        %v410 = vsel %vm404, %v397, 920167782
        %v411 = vsel %vm403, %v394, %v410
        %v412 = vsel %vm402, %v409, %v411
        %v413 = vsel %vm401, %v391, %v394
        %v414 = vsel %vm404, %v400, 1326507024
        %v415 = vsel %vm403, %v397, %v414
        %v416 = vsel %vm402, %v413, %v415
        %v417 = vshll.u32 %v377, 8
        %v418 = vmul.u32.u64.compose %v417, %v416
        %v419 = vextract.low.u32 %v418
        %v420 = vextract.high.u32 %v418
        %v421 = vmul.u32.u64.compose %v417, %v412
        %v422 = vextract.low.u32 %v421
        %v423 = vextract.high.u32 %v421
        %v424 = vmul.u32 %v417, %v408
        %v425 = vadd.s32 %v420, %v422
        %vm426 = vc.u32 %v420, %v422
        %v427 = vadd.s32 %v423, 1
        %v428 = vsel %vm426, %v427, %v423
        %v429 = vadd.s32 %v424, %v428
        %v430 = vadd.s32 %v429, 536870912
        %v431 = vshrl.u32 %v430, 30
        %v432 = vshll.u32 %v431, 30
        %v433 = vsub.s32 %v429, %v432
        %vm434 = vcmp.lt.s32.totalorder %v433, 0
        %v435 = vsub.s32 0, %v433
        %v436 = vsel %vm434, %v435, %v433
        %v437 = vclz %v436
        %v438 = vsub.s32 %v437, 2
        %vm439 = vcmp.gt.s32.totalorder 0, %v438
        %v440 = vsel %vm439, 0, %v438
        %v441 = vsub.s32 32, %v440
        %v442 = vshll.u32 %v433, %v440
        %v443 = vshrl.u32 %v425, %v441
        %v444 = vor.u32 %v442, %v443
        %v445 = vsub.s32 4294967266, %v440
        %v446 = vadd.s32 %v445, 127
        %v447 = vshll.u32 %v446, 23
        %v448 = vor.u32 4788187, %v447
        %v449 = vand.u32 2147483647, %v448
        %v451 = vcvt.s32.f32 %v444
        %v452 = vmul.f32 %v451, %v449
        %v453 = vxor.u32 %v452, 2147483648
        %v454 = vsel %vm371, %v453, %v452
        %v455 = vsub.s32 4, %v431
        %v456 = vsel %vm371, %v455, %v431
        %v457 = vsel %vm370, %v361, %v454
        %v458 = vsel %vm370, 0, %v456
        %v459 = vcosq.f32.pop %v457
        %v460 = vsinq.f32.pop %v457
        %vm461 = vweird.f32 %v361
        %v462 = vand.u32 %v458, 3
        %vm463 = vcmp.lt.s32.totalorder %v462, 2
        %vm464 = vcmp.eq.s32.totalorder %v462, 0
        %v465 = vxor.u32 %v460, 2147483648
        %v466 = vsel %vm464, %v459, %v465
        %vm467 = vcmp.eq.s32.totalorder %v462, 2
        %v468 = vxor.u32 %v459, 2147483648
        %v469 = vsel %vm467, %v468, %v460
        %v470 = vsel %vm463, %v466, %v469
        %v471 = vsel %vm461, nan, %v470
        %v472 = vand.u32 2147483647, %v366
        %vm473 = vcmp.le.f32.partialorder %v472, 0.7853982
        %vm474 = vcmp.lt.s32.totalorder %v366, 0
        %v475 = vand.u32 %v366, 2139095040
        %v476 = vshrl.u32 %v475, 23
        %v477 = vsub.s32 %v476, 127
        %v478 = vand.u32 2147483647, %v366
        %v479 = vand.u32 %v478, 8388607
        %v480 = vor.u32 %v479, 8388608
        %v481 = vsub.s32 0, %v480
        %v482 = vadd.s32 %v477, 1
        %vm483 = vcmp.gt.s32.totalorder %v482, 0
        %v484 = vsel %vm483, %v482, 0
        %v485 = vshrl.u32 %v484, 5
        %v486 = vand.u32 %v484, 31
        %v487 = vsub.s32 32, %v486
        %v488 = vshrl.u32 683565275, %v487
        %v489 = vshll.u32 683565275, %v486
        %v490 = vshrl.u32 2475754826, %v487
        %v491 = vor.u32 %v489, %v490
        %v492 = vshll.u32 2475754826, %v486
        %v493 = vshrl.u32 2131351028, %v487
        %v494 = vor.u32 %v492, %v493
        %v495 = vshll.u32 2131351028, %v486
        %v496 = vshrl.u32 2102212464, %v487
        %v497 = vor.u32 %v495, %v496
        %v498 = vshll.u32 2102212464, %v486
        %v499 = vshrl.u32 920167782, %v487
        %v500 = vor.u32 %v498, %v499
        %v501 = vshll.u32 920167782, %v486
        %v502 = vshrl.u32 1326507024, %v487
        %v503 = vor.u32 %v501, %v502
        %vm504 = vcmp.lt.s32.totalorder %v485, 1
        %vm505 = vcmp.lt.s32.totalorder %v485, 2
        %vm506 = vcmp.lt.s32.totalorder %v485, 3
        %vm507 = vcmp.lt.s32.totalorder %v485, 4
        %v508 = vsel %vm504, %v488, %v491
        %v509 = vsel %vm507, %v497, 2102212464
        %v510 = vsel %vm506, %v494, %v509
        %v511 = vsel %vm505, %v508, %v510
        %v512 = vsel %vm504, %v491, %v494
        %v513 = vsel %vm507, %v500, 920167782
        %v514 = vsel %vm506, %v497, %v513
        %v515 = vsel %vm505, %v512, %v514
        %v516 = vsel %vm504, %v494, %v497
        %v517 = vsel %vm507, %v503, 1326507024
        %v518 = vsel %vm506, %v500, %v517
        %v519 = vsel %vm505, %v516, %v518
        %v520 = vshll.u32 %v480, 8
        %v521 = vmul.u32.u64.compose %v520, %v519
        %v522 = vextract.low.u32 %v521
        %v523 = vextract.high.u32 %v521
        %v524 = vmul.u32.u64.compose %v520, %v515
        %v525 = vextract.low.u32 %v524
        %v526 = vextract.high.u32 %v524
        %v527 = vmul.u32 %v520, %v511
        %v528 = vadd.s32 %v523, %v525
        %vm529 = vc.u32 %v523, %v525
        %v530 = vadd.s32 %v526, 1
        %v531 = vsel %vm529, %v530, %v526
        %v532 = vadd.s32 %v527, %v531
        %v533 = vadd.s32 %v532, 536870912
        %v534 = vshrl.u32 %v533, 30
        %v535 = vshll.u32 %v534, 30
        %v536 = vsub.s32 %v532, %v535
        %vm537 = vcmp.lt.s32.totalorder %v536, 0
        %v538 = vsub.s32 0, %v536
        %v539 = vsel %vm537, %v538, %v536
        %v540 = vclz %v539
        %v541 = vsub.s32 %v540, 2
        %vm542 = vcmp.gt.s32.totalorder 0, %v541
        %v543 = vsel %vm542, 0, %v541
        %v544 = vsub.s32 32, %v543
        %v545 = vshll.u32 %v536, %v543
        %v546 = vshrl.u32 %v528, %v544
        %v547 = vor.u32 %v545, %v546
        %v548 = vsub.s32 4294967266, %v543
        %v549 = vadd.s32 %v548, 127
        %v550 = vshll.u32 %v549, 23
        %v551 = vor.u32 4788187, %v550
        %v552 = vand.u32 2147483647, %v551
        %v554 = vcvt.s32.f32 %v547
        %v555 = vmul.f32 %v554, %v552
        %v556 = vxor.u32 %v555, 2147483648
        %v557 = vsel %vm474, %v556, %v555
        %v558 = vsub.s32 4, %v534
        %v559 = vsel %vm474, %v558, %v534
        %v560 = vsel %vm473, %v366, %v557
        %v561 = vsel %vm473, 0, %v559
        %v562 = vcosq.f32.pop %v560
        %v563 = vsinq.f32.pop %v560
        %vm564 = vweird.f32 %v366
        %v565 = vand.u32 %v561, 3
        %vm566 = vcmp.lt.s32.totalorder %v565, 2
        %vm567 = vcmp.eq.s32.totalorder %v565, 0
        %v568 = vxor.u32 %v563, 2147483648
        %v569 = vsel %vm567, %v562, %v568
        %vm570 = vcmp.eq.s32.totalorder %v565, 2
        %v571 = vxor.u32 %v562, 2147483648
        %v572 = vsel %vm570, %v571, %v563
        %v573 = vsel %vm566, %v569, %v572
        %v574 = vsel %vm564, nan, %v573
        %v575 = vand.u32 2147483647, %v361
        %vm576 = vcmp.le.f32.partialorder %v575, 0.7853982
        %vm577 = vcmp.lt.s32.totalorder %v361, 0
        %v578 = vand.u32 %v361, 2139095040
        %v579 = vshrl.u32 %v578, 23
        %v580 = vsub.s32 %v579, 127
        %v581 = vand.u32 2147483647, %v361
        %v582 = vand.u32 %v581, 8388607
        %v583 = vor.u32 %v582, 8388608
        %v584 = vsub.s32 0, %v583
        %v585 = vadd.s32 %v580, 1
        %vm586 = vcmp.gt.s32.totalorder %v585, 0
        %v587 = vsel %vm586, %v585, 0
        %v588 = vshrl.u32 %v587, 5
        %v589 = vand.u32 %v587, 31
        %v590 = vsub.s32 32, %v589
        %v591 = vshrl.u32 683565275, %v590
        %v592 = vshll.u32 683565275, %v589
        %v593 = vshrl.u32 2475754826, %v590
        %v594 = vor.u32 %v592, %v593
        %v595 = vshll.u32 2475754826, %v589
        %v596 = vshrl.u32 2131351028, %v590
        %v597 = vor.u32 %v595, %v596
        %v598 = vshll.u32 2131351028, %v589
        %v599 = vshrl.u32 2102212464, %v590
        %v600 = vor.u32 %v598, %v599
        %v601 = vshll.u32 2102212464, %v589
        %v602 = vshrl.u32 920167782, %v590
        %v603 = vor.u32 %v601, %v602
        %v604 = vshll.u32 920167782, %v589
        %v605 = vshrl.u32 1326507024, %v590
        %v606 = vor.u32 %v604, %v605
        %vm607 = vcmp.lt.s32.totalorder %v588, 1
        %vm608 = vcmp.lt.s32.totalorder %v588, 2
        %vm609 = vcmp.lt.s32.totalorder %v588, 3
        %vm610 = vcmp.lt.s32.totalorder %v588, 4
        %v611 = vsel %vm607, %v591, %v594
        %v612 = vsel %vm610, %v600, 2102212464
        %v613 = vsel %vm609, %v597, %v612
        %v614 = vsel %vm608, %v611, %v613
        %v615 = vsel %vm607, %v594, %v597
        %v616 = vsel %vm610, %v603, 920167782
        %v617 = vsel %vm609, %v600, %v616
        %v618 = vsel %vm608, %v615, %v617
        %v619 = vsel %vm607, %v597, %v600
        %v620 = vsel %vm610, %v606, 1326507024
        %v621 = vsel %vm609, %v603, %v620
        %v622 = vsel %vm608, %v619, %v621
        %v623 = vshll.u32 %v583, 8
        %v624 = vmul.u32.u64.compose %v623, %v622
        %v625 = vextract.low.u32 %v624
        %v626 = vextract.high.u32 %v624
        %v627 = vmul.u32.u64.compose %v623, %v618
        %v628 = vextract.low.u32 %v627
        %v629 = vextract.high.u32 %v627
        %v630 = vmul.u32 %v623, %v614
        %v631 = vadd.s32 %v626, %v628
        %vm632 = vc.u32 %v626, %v628
        %v633 = vadd.s32 %v629, 1
        %v634 = vsel %vm632, %v633, %v629
        %v635 = vadd.s32 %v630, %v634
        %v636 = vadd.s32 %v635, 536870912
        %v637 = vshrl.u32 %v636, 30
        %v638 = vshll.u32 %v637, 30
        %v639 = vsub.s32 %v635, %v638
        %vm640 = vcmp.lt.s32.totalorder %v639, 0
        %v641 = vsub.s32 0, %v639
        %v642 = vsel %vm640, %v641, %v639
        %v643 = vclz %v642
        %v644 = vsub.s32 %v643, 2
        %vm645 = vcmp.gt.s32.totalorder 0, %v644
        %v646 = vsel %vm645, 0, %v644
        %v647 = vsub.s32 32, %v646
        %v648 = vshll.u32 %v639, %v646
        %v649 = vshrl.u32 %v631, %v647
        %v650 = vor.u32 %v648, %v649
        %v651 = vsub.s32 4294967266, %v646
        %v652 = vadd.s32 %v651, 127
        %v653 = vshll.u32 %v652, 23
        %v654 = vor.u32 4788187, %v653
        %v655 = vand.u32 2147483647, %v654
        %v657 = vcvt.s32.f32 %v650
        %v658 = vmul.f32 %v657, %v655
        %v659 = vxor.u32 %v658, 2147483648
        %v660 = vsel %vm577, %v659, %v658
        %v661 = vsub.s32 4, %v637
        %v662 = vsel %vm577, %v661, %v637
        %v663 = vsel %vm576, %v361, %v660
        %v664 = vsel %vm576, 0, %v662
        %v665 = vcosq.f32.pop %v663
        %v666 = vsinq.f32.pop %v663
        %vm667 = vweird.f32 %v361
        %v668 = vadd.s32 %v664, 3
        %v669 = vand.u32 %v668, 3
        %vm670 = vcmp.lt.s32.totalorder %v669, 2
        %vm671 = vcmp.eq.s32.totalorder %v669, 0
        %v672 = vxor.u32 %v666, 2147483648
        %v673 = vsel %vm671, %v665, %v672
        %vm674 = vcmp.eq.s32.totalorder %v669, 2
        %v675 = vxor.u32 %v665, 2147483648
        %v676 = vsel %vm674, %v675, %v666
        %v677 = vsel %vm670, %v673, %v676
        %v678 = vsel %vm667, nan, %v677
        %v679 = vand.u32 2147483647, %v366
        %vm680 = vcmp.le.f32.partialorder %v679, 0.7853982
        %vm681 = vcmp.lt.s32.totalorder %v366, 0
        %v682 = vand.u32 %v366, 2139095040
        %v683 = vshrl.u32 %v682, 23
        %v684 = vsub.s32 %v683, 127
        %v685 = vand.u32 2147483647, %v366
        %v686 = vand.u32 %v685, 8388607
        %v687 = vor.u32 %v686, 8388608
        %v688 = vsub.s32 0, %v687
        %v689 = vadd.s32 %v684, 1
        %vm690 = vcmp.gt.s32.totalorder %v689, 0
        %v691 = vsel %vm690, %v689, 0
        %v692 = vshrl.u32 %v691, 5
        %v693 = vand.u32 %v691, 31
        %v694 = vsub.s32 32, %v693
        %v695 = vshrl.u32 683565275, %v694
        %v696 = vshll.u32 683565275, %v693
        %v697 = vshrl.u32 2475754826, %v694
        %v698 = vor.u32 %v696, %v697
        %v699 = vshll.u32 2475754826, %v693
        %v700 = vshrl.u32 2131351028, %v694
        %v701 = vor.u32 %v699, %v700
        %v702 = vshll.u32 2131351028, %v693
        %v703 = vshrl.u32 2102212464, %v694
        %v704 = vor.u32 %v702, %v703
        %v705 = vshll.u32 2102212464, %v693
        %v706 = vshrl.u32 920167782, %v694
        %v707 = vor.u32 %v705, %v706
        %v708 = vshll.u32 920167782, %v693
        %v709 = vshrl.u32 1326507024, %v694
        %v710 = vor.u32 %v708, %v709
        %vm711 = vcmp.lt.s32.totalorder %v692, 1
        %vm712 = vcmp.lt.s32.totalorder %v692, 2
        %vm713 = vcmp.lt.s32.totalorder %v692, 3
        %vm714 = vcmp.lt.s32.totalorder %v692, 4
        %v715 = vsel %vm711, %v695, %v698
        %v716 = vsel %vm714, %v704, 2102212464
        %v717 = vsel %vm713, %v701, %v716
        %v718 = vsel %vm712, %v715, %v717
        %v719 = vsel %vm711, %v698, %v701
        %v720 = vsel %vm714, %v707, 920167782
        %v721 = vsel %vm713, %v704, %v720
        %v722 = vsel %vm712, %v719, %v721
        %v723 = vsel %vm711, %v701, %v704
        %v724 = vsel %vm714, %v710, 1326507024
        %v725 = vsel %vm713, %v707, %v724
        %v726 = vsel %vm712, %v723, %v725
        %v727 = vshll.u32 %v687, 8
        %v728 = vmul.u32.u64.compose %v727, %v726
        %v729 = vextract.low.u32 %v728
        %v730 = vextract.high.u32 %v728
        %v731 = vmul.u32.u64.compose %v727, %v722
        %v732 = vextract.low.u32 %v731
        %v733 = vextract.high.u32 %v731
        %v734 = vmul.u32 %v727, %v718
        %v735 = vadd.s32 %v730, %v732
        %vm736 = vc.u32 %v730, %v732
        %v737 = vadd.s32 %v733, 1
        %v738 = vsel %vm736, %v737, %v733
        %v739 = vadd.s32 %v734, %v738
        %v740 = vadd.s32 %v739, 536870912
        %v741 = vshrl.u32 %v740, 30
        %v742 = vshll.u32 %v741, 30
        %v743 = vsub.s32 %v739, %v742
        %vm744 = vcmp.lt.s32.totalorder %v743, 0
        %v745 = vsub.s32 0, %v743
        %v746 = vsel %vm744, %v745, %v743
        %v747 = vclz %v746
        %v748 = vsub.s32 %v747, 2
        %vm749 = vcmp.gt.s32.totalorder 0, %v748
        %v750 = vsel %vm749, 0, %v748
        %v751 = vsub.s32 32, %v750
        %v752 = vshll.u32 %v743, %v750
        %v753 = vshrl.u32 %v735, %v751
        %v754 = vor.u32 %v752, %v753
        %v755 = vsub.s32 4294967266, %v750
        %v756 = vadd.s32 %v755, 127
        %v757 = vshll.u32 %v756, 23
        %v758 = vor.u32 4788187, %v757
        %v759 = vand.u32 2147483647, %v758
        %v761 = vcvt.s32.f32 %v754
        %v762 = vmul.f32 %v761, %v759
        %v763 = vxor.u32 %v762, 2147483648
        %v764 = vsel %vm681, %v763, %v762
        %v765 = vsub.s32 4, %v741
        %v766 = vsel %vm681, %v765, %v741
        %v767 = vsel %vm680, %v366, %v764
        %v768 = vsel %vm680, 0, %v766
        %v769 = vcosq.f32.pop %v767
        %v770 = vsinq.f32.pop %v767
        %vm771 = vweird.f32 %v366
        %v772 = vadd.s32 %v768, 3
        %v773 = vand.u32 %v772, 3
        %vm774 = vcmp.lt.s32.totalorder %v773, 2
        %vm775 = vcmp.eq.s32.totalorder %v773, 0
        %v776 = vxor.u32 %v770, 2147483648
        %v777 = vsel %vm775, %v769, %v776
        %vm778 = vcmp.eq.s32.totalorder %v773, 2
        %v779 = vxor.u32 %v769, 2147483648
        %v780 = vsel %vm778, %v779, %v770
        %v781 = vsel %vm774, %v777, %v780
        %v782 = vsel %vm771, nan, %v781
        %v783 = vld [vmem:[%s2] sm:$0xff]
        %v784 = vld [vmem:[%s2 + $0x8] sm:$0xff]
        %v785 = vld [vmem:[%s3] sm:$0xff]
        %v786 = vld [vmem:[%s3 + $0x8] sm:$0xff]
        %vm787 = vcmask 130048
        %v789 = vsel %vm787, %v678, 0
        %v792 = vsel %vm787, %v782, 0
        %794 = vmatprep.subr.mxu0 0.0
        %795 = vmatpush1.msra.mxu0 %v785
        %796 = vmatprep.subr.mxu0 0.0
        %797 = vmatpush1.msra.mxu0 %v786
        %798 = vmatprep.subr.mxu0 0.0
        %799 = vmatpush1.msra.mxu0 0.0
        %800 = vmatprep.subr.mxu0 0.0
        %801 = vmatpush1.msra.mxu0 0.0
        %802 = vmatprep.subr.mxu0 0.0
        %803 = vmatpush1.msra.mxu0 0.0
        %804 = vmatprep.subr.mxu0 0.0
        %805 = vmatpush1.msra.mxu0 0.0
        %806 = vmatprep.subr.mxu0 0.0
        %807 = vmatpush1.msra.mxu0 0.0
        %808 = vmatprep.subr.mxu0 0.0
        %809 = vmatpush1.msra.mxu0 0.0
        %810 = vmatprep.subr.mxu0 0.0
        %811 = vmatpush1.msra.mxu0 0.0
        %812 = vmatprep.subr.mxu0 0.0
        %813 = vmatpush1.msra.mxu0 0.0
        %814 = vmatprep.subr.mxu0 0.0
        %815 = vmatpush1.msra.mxu0 0.0
        %816 = vmatprep.subr.mxu0 0.0
        %817 = vmatpush1.msra.mxu0 0.0
        %818 = vmatprep.subr.mxu0 0.0
        %819 = vmatpush1.msra.mxu0 0.0
        %820 = vmatprep.subr.mxu0 0.0
        %821 = vmatpush1.msra.mxu0 0.0
        %822 = vmatprep.subr.mxu0 0.0
        %823 = vmatpush1.msra.mxu0 0.0
        %824 = vmatprep.subr.mxu0 0.0
        %825 = vmatpush1.msra.mxu0 0.0
        %826 = vmatprep.subr.mxu0 0.0
        %827 = vmatpush1.msra.mxu0 0.0
        %828 = vmatprep.subr.mxu0 0.0
        %829 = vmatpush1.msra.mxu0 0.0
        %830 = vmatprep.subr.mxu0 0.0
        %831 = vmatpush1.msra.mxu0 0.0
        %832 = vmatprep.subr.mxu0 0.0
        %833 = vmatpush1.msra.mxu0 0.0
        %834 = vmatprep.subr.mxu0 0.0
        %835 = vmatpush1.msra.mxu0 0.0
        %836 = vmatprep.subr.mxu0 0.0
        %837 = vmatpush1.msra.mxu0 0.0
        %838 = vmatprep.subr.mxu0 0.0
        %839 = vmatpush1.msra.mxu0 0.0
        %840 = vmatprep.subr.mxu0 0.0
        %841 = vmatpush1.msra.mxu0 0.0
        %842 = vmatprep.subr.mxu0 0.0
        %843 = vmatpush1.msra.mxu0 0.0
        %844 = vmatprep.subr.mxu0 0.0
        %845 = vmatpush1.msra.mxu0 0.0
        %846 = vmatprep.subr.mxu0 0.0
        %847 = vmatpush1.msra.mxu0 0.0
        %848 = vmatprep.subr.mxu0 0.0
        %849 = vmatpush1.msra.mxu0 0.0
        %850 = vmatprep.subr.mxu0 0.0
        %851 = vmatpush1.msra.mxu0 0.0
        %852 = vmatprep.subr.mxu0 0.0
        %853 = vmatpush1.msra.mxu0 0.0
        %854 = vmatprep.subr.mxu0 0.0
        %855 = vmatpush1.msra.mxu0 0.0
        %856 = vmatprep.subr.mxu0 0.0
        %857 = vmatpush1.msra.mxu0 0.0
        %858 = vmatprep.mubr.f32.mxu0 0.0
        %859 = vmatmul.mubr.f32.gmra.mrb[0].mxu0 %v789
        %v860 = vpop.f32.mrb[0].mxu0
        %v861 = vadd.f32 0.0, %v860
        %v862 = vpop.f32.mrb[0].mxu0
        %863 = vmatprep.mubr.f32.mxu0 0.0
        %864 = vmatmul.mubr.f32.gmra.mrb[0].mxu0 %v792
        %v865 = vpop.f32.mrb[0].mxu0
        %v866 = vadd.f32 0.0, %v865
        %v867 = vpop.f32.mrb[0].mxu0
        %868 = vdwg.mxu0
        %v870 = vsel %vm787, %v471, 0
        %v873 = vsel %vm787, %v574, 0
        %875 = vmatprep.subr.mxu0 0.0
        %876 = vmatpush1.msra.mxu0 %v783
        %877 = vmatprep.subr.mxu0 0.0
        %878 = vmatpush1.msra.mxu0 %v784
        %879 = vmatprep.subr.mxu0 0.0
        %880 = vmatpush1.msra.mxu0 0.0
        %881 = vmatprep.subr.mxu0 0.0
        %882 = vmatpush1.msra.mxu0 0.0
        %883 = vmatprep.subr.mxu0 0.0
        %884 = vmatpush1.msra.mxu0 0.0
        %885 = vmatprep.subr.mxu0 0.0
        %886 = vmatpush1.msra.mxu0 0.0
        %887 = vmatprep.subr.mxu0 0.0
        %888 = vmatpush1.msra.mxu0 0.0
        %889 = vmatprep.subr.mxu0 0.0
        %890 = vmatpush1.msra.mxu0 0.0
        %891 = vmatprep.subr.mxu0 0.0
        %892 = vmatpush1.msra.mxu0 0.0
        %893 = vmatprep.subr.mxu0 0.0
        %894 = vmatpush1.msra.mxu0 0.0
        %895 = vmatprep.subr.mxu0 0.0
        %896 = vmatpush1.msra.mxu0 0.0
        %897 = vmatprep.subr.mxu0 0.0
        %898 = vmatpush1.msra.mxu0 0.0
        %899 = vmatprep.subr.mxu0 0.0
        %900 = vmatpush1.msra.mxu0 0.0
        %901 = vmatprep.subr.mxu0 0.0
        %902 = vmatpush1.msra.mxu0 0.0
        %903 = vmatprep.subr.mxu0 0.0
        %904 = vmatpush1.msra.mxu0 0.0
        %905 = vmatprep.subr.mxu0 0.0
        %906 = vmatpush1.msra.mxu0 0.0
        %907 = vmatprep.subr.mxu0 0.0
        %908 = vmatpush1.msra.mxu0 0.0
        %909 = vmatprep.subr.mxu0 0.0
        %910 = vmatpush1.msra.mxu0 0.0
        %911 = vmatprep.subr.mxu0 0.0
        %912 = vmatpush1.msra.mxu0 0.0
        %913 = vmatprep.subr.mxu0 0.0
        %914 = vmatpush1.msra.mxu0 0.0
        %915 = vmatprep.subr.mxu0 0.0
        %916 = vmatpush1.msra.mxu0 0.0
        %917 = vmatprep.subr.mxu0 0.0
        %918 = vmatpush1.msra.mxu0 0.0
        %919 = vmatprep.subr.mxu0 0.0
        %920 = vmatpush1.msra.mxu0 0.0
        %921 = vmatprep.subr.mxu0 0.0
        %922 = vmatpush1.msra.mxu0 0.0
        %923 = vmatprep.subr.mxu0 0.0
        %924 = vmatpush1.msra.mxu0 0.0
        %925 = vmatprep.subr.mxu0 0.0
        %926 = vmatpush1.msra.mxu0 0.0
        %927 = vmatprep.subr.mxu0 0.0
        %928 = vmatpush1.msra.mxu0 0.0
        %929 = vmatprep.subr.mxu0 0.0
        %930 = vmatpush1.msra.mxu0 0.0
        %931 = vmatprep.subr.mxu0 0.0
        %932 = vmatpush1.msra.mxu0 0.0
        %933 = vmatprep.subr.mxu0 0.0
        %934 = vmatpush1.msra.mxu0 0.0
        %935 = vmatprep.subr.mxu0 0.0
        %936 = vmatpush1.msra.mxu0 0.0
        %937 = vmatprep.subr.mxu0 0.0
        %938 = vmatpush1.msra.mxu0 0.0
        %939 = vmatprep.mubr.f32.mxu0 0.0
        %940 = vmatmul.mubr.f32.gmra.mrb[0].mxu0 %v870
        %v941 = vpop.f32.mrb[0].mxu0
        %v942 = vadd.f32 %v861, %v941
        %v943 = vpop.f32.mrb[0].mxu0
        %944 = vmatprep.mubr.f32.mxu0 0.0
        %945 = vmatmul.mubr.f32.gmra.mrb[0].mxu0 %v873
        %v946 = vpop.f32.mrb[0].mxu0
        %v947 = vadd.f32 %v866, %v946
        %v948 = vpop.f32.mrb[0].mxu0
        %949 = vdwg.mxu0
        %v950 = vld [vmem:[%s4] sm:$0x1]
        %v952 = vlaneseq
        %v953 = vshrl.u32 %v952, 7
        %v954 = vsub.s32 0, %v953
        %v955 = vrot.slane %v950, %v954
        %v957 = vadd.f32 %v942, %v955
        %v958 = vadd.f32 %v947, %v955
        %v959 = vmul.f32 %v957, 0.5
        %v960 = vmul.f32 %v958, 0.5
        %v961 = vmul.f32 %v957, 0.70710677
        %v962 = vmul.f32 %v958, 0.70710677
        %v963 = verf.f32.pop %v961
        %v964 = verf.f32.pop %v962
        %v965 = vadd.f32 %v963, 1.0
        %v966 = vadd.f32 %v964, 1.0
        %v967 = vmul.f32 %v959, %v965
        %v968 = vmul.f32 %v960, %v966
        %969 = vrot.lane.b32.xlu0 %v280, 124
        %v970 = vpop.permute.xlu0 %969
        %971 = vrot.lane.b32.xlu0 %v281, 124
        %v972 = vpop.permute.xlu0 %971
        %v973 = vsel %vm283, %v970, 0
        %v975 = vsel %vm283, %v972, 0
        %977 = vmatprep.subr.mxu0 0.0
        %978 = vmatpush1.msra.mxu0 %v292
        %979 = vmatprep.subr.mxu0 0.0
        %980 = vmatpush1.msra.mxu0 0.0
        %981 = vmatprep.subr.mxu0 0.0
        %982 = vmatpush1.msra.mxu0 0.0
        %983 = vmatprep.subr.mxu0 0.0
        %984 = vmatpush1.msra.mxu0 0.0
        %985 = vmatprep.subr.mxu0 0.0
        %986 = vmatpush1.msra.mxu0 0.0
        %987 = vmatprep.subr.mxu0 0.0
        %988 = vmatpush1.msra.mxu0 0.0
        %989 = vmatprep.subr.mxu0 0.0
        %990 = vmatpush1.msra.mxu0 0.0
        %991 = vmatprep.subr.mxu0 0.0
        %992 = vmatpush1.msra.mxu0 0.0
        %993 = vmatprep.subr.mxu0 0.0
        %994 = vmatpush1.msra.mxu0 0.0
        %995 = vmatprep.subr.mxu0 0.0
        %996 = vmatpush1.msra.mxu0 0.0
        %997 = vmatprep.subr.mxu0 0.0
        %998 = vmatpush1.msra.mxu0 0.0
        %999 = vmatprep.subr.mxu0 0.0
        %1000 = vmatpush1.msra.mxu0 0.0
        %1001 = vmatprep.subr.mxu0 0.0
        %1002 = vmatpush1.msra.mxu0 0.0
        %1003 = vmatprep.subr.mxu0 0.0
        %1004 = vmatpush1.msra.mxu0 0.0
        %1005 = vmatprep.subr.mxu0 0.0
        %1006 = vmatpush1.msra.mxu0 0.0
        %1007 = vmatprep.subr.mxu0 0.0
        %1008 = vmatpush1.msra.mxu0 0.0
        %1009 = vmatprep.subr.mxu0 0.0
        %1010 = vmatpush1.msra.mxu0 0.0
        %1011 = vmatprep.subr.mxu0 0.0
        %1012 = vmatpush1.msra.mxu0 0.0
        %1013 = vmatprep.subr.mxu0 0.0
        %1014 = vmatpush1.msra.mxu0 0.0
        %1015 = vmatprep.subr.mxu0 0.0
        %1016 = vmatpush1.msra.mxu0 0.0
        %1017 = vmatprep.subr.mxu0 0.0
        %1018 = vmatpush1.msra.mxu0 0.0
        %1019 = vmatprep.subr.mxu0 0.0
        %1020 = vmatpush1.msra.mxu0 0.0
        %1021 = vmatprep.subr.mxu0 0.0
        %1022 = vmatpush1.msra.mxu0 0.0
        %1023 = vmatprep.subr.mxu0 0.0
        %1024 = vmatpush1.msra.mxu0 0.0
        %1025 = vmatprep.subr.mxu0 0.0
        %1026 = vmatpush1.msra.mxu0 0.0
        %1027 = vmatprep.subr.mxu0 0.0
        %1028 = vmatpush1.msra.mxu0 0.0
        %1029 = vmatprep.subr.mxu0 0.0
        %1030 = vmatpush1.msra.mxu0 0.0
        %1031 = vmatprep.subr.mxu0 0.0
        %1032 = vmatpush1.msra.mxu0 0.0
        %1033 = vmatprep.subr.mxu0 0.0
        %1034 = vmatpush1.msra.mxu0 0.0
        %1035 = vmatprep.subr.mxu0 0.0
        %1036 = vmatpush1.msra.mxu0 0.0
        %1037 = vmatprep.subr.mxu0 0.0
        %1038 = vmatpush1.msra.mxu0 0.0
        %1039 = vmatprep.subr.mxu0 0.0
        %1040 = vmatpush1.msra.mxu0 0.0
        %1041 = vmatprep.mubr.f32.mxu0 0.0
        %1042 = vmatmul.mubr.f32.gmra.mrb[0].mxu0 %v973
        %v1043 = vpop.f32.mrb[0].mxu0
        %v1044 = vadd.f32 0.0, %v1043
        %v1045 = vpop.f32.mrb[0].mxu0
        %1046 = vmatprep.mubr.f32.mxu0 0.0
        %1047 = vmatmul.mubr.f32.gmra.mrb[0].mxu0 %v975
        %v1048 = vpop.f32.mrb[0].mxu0
        %v1049 = vadd.f32 0.0, %v1048
        %v1050 = vpop.f32.mrb[0].mxu0
        %1051 = vdwg.mxu0
        %v1052 = vand.u32 2147483647, %v1044
        %vm1053 = vcmp.le.f32.partialorder %v1052, 0.7853982
        %vm1054 = vcmp.lt.s32.totalorder %v1044, 0
        %v1055 = vand.u32 %v1044, 2139095040
        %v1056 = vshrl.u32 %v1055, 23
        %v1057 = vsub.s32 %v1056, 127
        %v1058 = vand.u32 2147483647, %v1044
        %v1059 = vand.u32 %v1058, 8388607
        %v1060 = vor.u32 %v1059, 8388608
        %v1061 = vsub.s32 0, %v1060
        %v1062 = vadd.s32 %v1057, 1
        %vm1063 = vcmp.gt.s32.totalorder %v1062, 0
        %v1064 = vsel %vm1063, %v1062, 0
        %v1065 = vshrl.u32 %v1064, 5
        %v1066 = vand.u32 %v1064, 31
        %v1067 = vsub.s32 32, %v1066
        %v1068 = vshrl.u32 683565275, %v1067
        %v1069 = vshll.u32 683565275, %v1066
        %v1070 = vshrl.u32 2475754826, %v1067
        %v1071 = vor.u32 %v1069, %v1070
        %v1072 = vshll.u32 2475754826, %v1066
        %v1073 = vshrl.u32 2131351028, %v1067
        %v1074 = vor.u32 %v1072, %v1073
        %v1075 = vshll.u32 2131351028, %v1066
        %v1076 = vshrl.u32 2102212464, %v1067
        %v1077 = vor.u32 %v1075, %v1076
        %v1078 = vshll.u32 2102212464, %v1066
        %v1079 = vshrl.u32 920167782, %v1067
        %v1080 = vor.u32 %v1078, %v1079
        %v1081 = vshll.u32 920167782, %v1066
        %v1082 = vshrl.u32 1326507024, %v1067
        %v1083 = vor.u32 %v1081, %v1082
        %vm1084 = vcmp.lt.s32.totalorder %v1065, 1
        %vm1085 = vcmp.lt.s32.totalorder %v1065, 2
        %vm1086 = vcmp.lt.s32.totalorder %v1065, 3
        %vm1087 = vcmp.lt.s32.totalorder %v1065, 4
        %v1088 = vsel %vm1084, %v1068, %v1071
        %v1089 = vsel %vm1087, %v1077, 2102212464
        %v1090 = vsel %vm1086, %v1074, %v1089
        %v1091 = vsel %vm1085, %v1088, %v1090
        %v1092 = vsel %vm1084, %v1071, %v1074
        %v1093 = vsel %vm1087, %v1080, 920167782
        %v1094 = vsel %vm1086, %v1077, %v1093
        %v1095 = vsel %vm1085, %v1092, %v1094
        %v1096 = vsel %vm1084, %v1074, %v1077
        %v1097 = vsel %vm1087, %v1083, 1326507024
        %v1098 = vsel %vm1086, %v1080, %v1097
        %v1099 = vsel %vm1085, %v1096, %v1098
        %v1100 = vshll.u32 %v1060, 8
        %v1101 = vmul.u32.u64.compose %v1100, %v1099
        %v1102 = vextract.low.u32 %v1101
        %v1103 = vextract.high.u32 %v1101
        %v1104 = vmul.u32.u64.compose %v1100, %v1095
        %v1105 = vextract.low.u32 %v1104
        %v1106 = vextract.high.u32 %v1104
        %v1107 = vmul.u32 %v1100, %v1091
        %v1108 = vadd.s32 %v1103, %v1105
        %vm1109 = vc.u32 %v1103, %v1105
        %v1110 = vadd.s32 %v1106, 1
        %v1111 = vsel %vm1109, %v1110, %v1106
        %v1112 = vadd.s32 %v1107, %v1111
        %v1113 = vadd.s32 %v1112, 536870912
        %v1114 = vshrl.u32 %v1113, 30
        %v1115 = vshll.u32 %v1114, 30
        %v1116 = vsub.s32 %v1112, %v1115
        %vm1117 = vcmp.lt.s32.totalorder %v1116, 0
        %v1118 = vsub.s32 0, %v1116
        %v1119 = vsel %vm1117, %v1118, %v1116
        %v1120 = vclz %v1119
        %v1121 = vsub.s32 %v1120, 2
        %vm1122 = vcmp.gt.s32.totalorder 0, %v1121
        %v1123 = vsel %vm1122, 0, %v1121
        %v1124 = vsub.s32 32, %v1123
        %v1125 = vshll.u32 %v1116, %v1123
        %v1126 = vshrl.u32 %v1108, %v1124
        %v1127 = vor.u32 %v1125, %v1126
        %v1128 = vsub.s32 4294967266, %v1123
        %v1129 = vadd.s32 %v1128, 127
        %v1130 = vshll.u32 %v1129, 23
        %v1131 = vor.u32 4788187, %v1130
        %v1132 = vand.u32 2147483647, %v1131
        %v1134 = vcvt.s32.f32 %v1127
        %v1135 = vmul.f32 %v1134, %v1132
        %v1136 = vxor.u32 %v1135, 2147483648
        %v1137 = vsel %vm1054, %v1136, %v1135
        %v1138 = vsub.s32 4, %v1114
        %v1139 = vsel %vm1054, %v1138, %v1114
        %v1140 = vsel %vm1053, %v1044, %v1137
        %v1141 = vsel %vm1053, 0, %v1139
        %v1142 = vcosq.f32.pop %v1140
        %v1143 = vsinq.f32.pop %v1140
        %vm1144 = vweird.f32 %v1044
        %v1145 = vand.u32 %v1141, 3
        %vm1146 = vcmp.lt.s32.totalorder %v1145, 2
        %vm1147 = vcmp.eq.s32.totalorder %v1145, 0
        %v1148 = vxor.u32 %v1143, 2147483648
        %v1149 = vsel %vm1147, %v1142, %v1148
        %vm1150 = vcmp.eq.s32.totalorder %v1145, 2
        %v1151 = vxor.u32 %v1142, 2147483648
        %v1152 = vsel %vm1150, %v1151, %v1143
        %v1153 = vsel %vm1146, %v1149, %v1152
        %v1154 = vsel %vm1144, nan, %v1153
        %v1155 = vand.u32 2147483647, %v1049
        %vm1156 = vcmp.le.f32.partialorder %v1155, 0.7853982
        %vm1157 = vcmp.lt.s32.totalorder %v1049, 0
        %v1158 = vand.u32 %v1049, 2139095040
        %v1159 = vshrl.u32 %v1158, 23
        %v1160 = vsub.s32 %v1159, 127
        %v1161 = vand.u32 2147483647, %v1049
        %v1162 = vand.u32 %v1161, 8388607
        %v1163 = vor.u32 %v1162, 8388608
        %v1164 = vsub.s32 0, %v1163
        %v1165 = vadd.s32 %v1160, 1
        %vm1166 = vcmp.gt.s32.totalorder %v1165, 0
        %v1167 = vsel %vm1166, %v1165, 0
        %v1168 = vshrl.u32 %v1167, 5
        %v1169 = vand.u32 %v1167, 31
        %v1170 = vsub.s32 32, %v1169
        %v1171 = vshrl.u32 683565275, %v1170
        %v1172 = vshll.u32 683565275, %v1169
        %v1173 = vshrl.u32 2475754826, %v1170
        %v1174 = vor.u32 %v1172, %v1173
        %v1175 = vshll.u32 2475754826, %v1169
        %v1176 = vshrl.u32 2131351028, %v1170
        %v1177 = vor.u32 %v1175, %v1176
        %v1178 = vshll.u32 2131351028, %v1169
        %v1179 = vshrl.u32 2102212464, %v1170
        %v1180 = vor.u32 %v1178, %v1179
        %v1181 = vshll.u32 2102212464, %v1169
        %v1182 = vshrl.u32 920167782, %v1170
        %v1183 = vor.u32 %v1181, %v1182
        %v1184 = vshll.u32 920167782, %v1169
        %v1185 = vshrl.u32 1326507024, %v1170
        %v1186 = vor.u32 %v1184, %v1185
        %vm1187 = vcmp.lt.s32.totalorder %v1168, 1
        %vm1188 = vcmp.lt.s32.totalorder %v1168, 2
        %vm1189 = vcmp.lt.s32.totalorder %v1168, 3
        %vm1190 = vcmp.lt.s32.totalorder %v1168, 4
        %v1191 = vsel %vm1187, %v1171, %v1174
        %v1192 = vsel %vm1190, %v1180, 2102212464
        %v1193 = vsel %vm1189, %v1177, %v1192
        %v1194 = vsel %vm1188, %v1191, %v1193
        %v1195 = vsel %vm1187, %v1174, %v1177
        %v1196 = vsel %vm1190, %v1183, 920167782
        %v1197 = vsel %vm1189, %v1180, %v1196
        %v1198 = vsel %vm1188, %v1195, %v1197
        %v1199 = vsel %vm1187, %v1177, %v1180
        %v1200 = vsel %vm1190, %v1186, 1326507024
        %v1201 = vsel %vm1189, %v1183, %v1200
        %v1202 = vsel %vm1188, %v1199, %v1201
        %v1203 = vshll.u32 %v1163, 8
        %v1204 = vmul.u32.u64.compose %v1203, %v1202
        %v1205 = vextract.low.u32 %v1204
        %v1206 = vextract.high.u32 %v1204
        %v1207 = vmul.u32.u64.compose %v1203, %v1198
        %v1208 = vextract.low.u32 %v1207
        %v1209 = vextract.high.u32 %v1207
        %v1210 = vmul.u32 %v1203, %v1194
        %v1211 = vadd.s32 %v1206, %v1208
        %vm1212 = vc.u32 %v1206, %v1208
        %v1213 = vadd.s32 %v1209, 1
        %v1214 = vsel %vm1212, %v1213, %v1209
        %v1215 = vadd.s32 %v1210, %v1214
        %v1216 = vadd.s32 %v1215, 536870912
        %v1217 = vshrl.u32 %v1216, 30
        %v1218 = vshll.u32 %v1217, 30
        %v1219 = vsub.s32 %v1215, %v1218
        %vm1220 = vcmp.lt.s32.totalorder %v1219, 0
        %v1221 = vsub.s32 0, %v1219
        %v1222 = vsel %vm1220, %v1221, %v1219
        %v1223 = vclz %v1222
        %v1224 = vsub.s32 %v1223, 2
        %vm1225 = vcmp.gt.s32.totalorder 0, %v1224
        %v1226 = vsel %vm1225, 0, %v1224
        %v1227 = vsub.s32 32, %v1226
        %v1228 = vshll.u32 %v1219, %v1226
        %v1229 = vshrl.u32 %v1211, %v1227
        %v1230 = vor.u32 %v1228, %v1229
        %v1231 = vsub.s32 4294967266, %v1226
        %v1232 = vadd.s32 %v1231, 127
        %v1233 = vshll.u32 %v1232, 23
        %v1234 = vor.u32 4788187, %v1233
        %v1235 = vand.u32 2147483647, %v1234
        %v1237 = vcvt.s32.f32 %v1230
        %v1238 = vmul.f32 %v1237, %v1235
        %v1239 = vxor.u32 %v1238, 2147483648
        %v1240 = vsel %vm1157, %v1239, %v1238
        %v1241 = vsub.s32 4, %v1217
        %v1242 = vsel %vm1157, %v1241, %v1217
        %v1243 = vsel %vm1156, %v1049, %v1240
        %v1244 = vsel %vm1156, 0, %v1242
        %v1245 = vcosq.f32.pop %v1243
        %v1246 = vsinq.f32.pop %v1243
        %vm1247 = vweird.f32 %v1049
        %v1248 = vand.u32 %v1244, 3
        %vm1249 = vcmp.lt.s32.totalorder %v1248, 2
        %vm1250 = vcmp.eq.s32.totalorder %v1248, 0
        %v1251 = vxor.u32 %v1246, 2147483648
        %v1252 = vsel %vm1250, %v1245, %v1251
        %vm1253 = vcmp.eq.s32.totalorder %v1248, 2
        %v1254 = vxor.u32 %v1245, 2147483648
        %v1255 = vsel %vm1253, %v1254, %v1246
        %v1256 = vsel %vm1249, %v1252, %v1255
        %v1257 = vsel %vm1247, nan, %v1256
        %v1258 = vand.u32 2147483647, %v1044
        %vm1259 = vcmp.le.f32.partialorder %v1258, 0.7853982
        %vm1260 = vcmp.lt.s32.totalorder %v1044, 0
        %v1261 = vand.u32 %v1044, 2139095040
        %v1262 = vshrl.u32 %v1261, 23
        %v1263 = vsub.s32 %v1262, 127
        %v1264 = vand.u32 2147483647, %v1044
        %v1265 = vand.u32 %v1264, 8388607
        %v1266 = vor.u32 %v1265, 8388608
        %v1267 = vsub.s32 0, %v1266
        %v1268 = vadd.s32 %v1263, 1
        %vm1269 = vcmp.gt.s32.totalorder %v1268, 0
        %v1270 = vsel %vm1269, %v1268, 0
        %v1271 = vshrl.u32 %v1270, 5
        %v1272 = vand.u32 %v1270, 31
        %v1273 = vsub.s32 32, %v1272
        %v1274 = vshrl.u32 683565275, %v1273
        %v1275 = vshll.u32 683565275, %v1272
        %v1276 = vshrl.u32 2475754826, %v1273
        %v1277 = vor.u32 %v1275, %v1276
        %v1278 = vshll.u32 2475754826, %v1272
        %v1279 = vshrl.u32 2131351028, %v1273
        %v1280 = vor.u32 %v1278, %v1279
        %v1281 = vshll.u32 2131351028, %v1272
        %v1282 = vshrl.u32 2102212464, %v1273
        %v1283 = vor.u32 %v1281, %v1282
        %v1284 = vshll.u32 2102212464, %v1272
        %v1285 = vshrl.u32 920167782, %v1273
        %v1286 = vor.u32 %v1284, %v1285
        %v1287 = vshll.u32 920167782, %v1272
        %v1288 = vshrl.u32 1326507024, %v1273
        %v1289 = vor.u32 %v1287, %v1288
        %vm1290 = vcmp.lt.s32.totalorder %v1271, 1
        %vm1291 = vcmp.lt.s32.totalorder %v1271, 2
        %vm1292 = vcmp.lt.s32.totalorder %v1271, 3
        %vm1293 = vcmp.lt.s32.totalorder %v1271, 4
        %v1294 = vsel %vm1290, %v1274, %v1277
        %v1295 = vsel %vm1293, %v1283, 2102212464
        %v1296 = vsel %vm1292, %v1280, %v1295
        %v1297 = vsel %vm1291, %v1294, %v1296
        %v1298 = vsel %vm1290, %v1277, %v1280
        %v1299 = vsel %vm1293, %v1286, 920167782
        %v1300 = vsel %vm1292, %v1283, %v1299
        %v1301 = vsel %vm1291, %v1298, %v1300
        %v1302 = vsel %vm1290, %v1280, %v1283
        %v1303 = vsel %vm1293, %v1289, 1326507024
        %v1304 = vsel %vm1292, %v1286, %v1303
        %v1305 = vsel %vm1291, %v1302, %v1304
        %v1306 = vshll.u32 %v1266, 8
        %v1307 = vmul.u32.u64.compose %v1306, %v1305
        %v1308 = vextract.low.u32 %v1307
        %v1309 = vextract.high.u32 %v1307
        %v1310 = vmul.u32.u64.compose %v1306, %v1301
        %v1311 = vextract.low.u32 %v1310
        %v1312 = vextract.high.u32 %v1310
        %v1313 = vmul.u32 %v1306, %v1297
        %v1314 = vadd.s32 %v1309, %v1311
        %vm1315 = vc.u32 %v1309, %v1311
        %v1316 = vadd.s32 %v1312, 1
        %v1317 = vsel %vm1315, %v1316, %v1312
        %v1318 = vadd.s32 %v1313, %v1317
        %v1319 = vadd.s32 %v1318, 536870912
        %v1320 = vshrl.u32 %v1319, 30
        %v1321 = vshll.u32 %v1320, 30
        %v1322 = vsub.s32 %v1318, %v1321
        %vm1323 = vcmp.lt.s32.totalorder %v1322, 0
        %v1324 = vsub.s32 0, %v1322
        %v1325 = vsel %vm1323, %v1324, %v1322
        %v1326 = vclz %v1325
        %v1327 = vsub.s32 %v1326, 2
        %vm1328 = vcmp.gt.s32.totalorder 0, %v1327
        %v1329 = vsel %vm1328, 0, %v1327
        %v1330 = vsub.s32 32, %v1329
        %v1331 = vshll.u32 %v1322, %v1329
        %v1332 = vshrl.u32 %v1314, %v1330
        %v1333 = vor.u32 %v1331, %v1332
        %v1334 = vsub.s32 4294967266, %v1329
        %v1335 = vadd.s32 %v1334, 127
        %v1336 = vshll.u32 %v1335, 23
        %v1337 = vor.u32 4788187, %v1336
        %v1338 = vand.u32 2147483647, %v1337
        %v1340 = vcvt.s32.f32 %v1333
        %v1341 = vmul.f32 %v1340, %v1338
        %v1342 = vxor.u32 %v1341, 2147483648
        %v1343 = vsel %vm1260, %v1342, %v1341
        %v1344 = vsub.s32 4, %v1320
        %v1345 = vsel %vm1260, %v1344, %v1320
        %v1346 = vsel %vm1259, %v1044, %v1343
        %v1347 = vsel %vm1259, 0, %v1345
        %v1348 = vcosq.f32.pop %v1346
        %v1349 = vsinq.f32.pop %v1346
        %vm1350 = vweird.f32 %v1044
        %v1351 = vadd.s32 %v1347, 3
        %v1352 = vand.u32 %v1351, 3
        %vm1353 = vcmp.lt.s32.totalorder %v1352, 2
        %vm1354 = vcmp.eq.s32.totalorder %v1352, 0
        %v1355 = vxor.u32 %v1349, 2147483648
        %v1356 = vsel %vm1354, %v1348, %v1355
        %vm1357 = vcmp.eq.s32.totalorder %v1352, 2
        %v1358 = vxor.u32 %v1348, 2147483648
        %v1359 = vsel %vm1357, %v1358, %v1349
        %v1360 = vsel %vm1353, %v1356, %v1359
        %v1361 = vsel %vm1350, nan, %v1360
        %v1362 = vand.u32 2147483647, %v1049
        %vm1363 = vcmp.le.f32.partialorder %v1362, 0.7853982
        %vm1364 = vcmp.lt.s32.totalorder %v1049, 0
        %v1365 = vand.u32 %v1049, 2139095040
        %v1366 = vshrl.u32 %v1365, 23
        %v1367 = vsub.s32 %v1366, 127
        %v1368 = vand.u32 2147483647, %v1049
        %v1369 = vand.u32 %v1368, 8388607
        %v1370 = vor.u32 %v1369, 8388608
        %v1371 = vsub.s32 0, %v1370
        %v1372 = vadd.s32 %v1367, 1
        %vm1373 = vcmp.gt.s32.totalorder %v1372, 0
        %v1374 = vsel %vm1373, %v1372, 0
        %v1375 = vshrl.u32 %v1374, 5
        %v1376 = vand.u32 %v1374, 31
        %v1377 = vsub.s32 32, %v1376
        %v1378 = vshrl.u32 683565275, %v1377
        %v1379 = vshll.u32 683565275, %v1376
        %v1380 = vshrl.u32 2475754826, %v1377
        %v1381 = vor.u32 %v1379, %v1380
        %v1382 = vshll.u32 2475754826, %v1376
        %v1383 = vshrl.u32 2131351028, %v1377
        %v1384 = vor.u32 %v1382, %v1383
        %v1385 = vshll.u32 2131351028, %v1376
        %v1386 = vshrl.u32 2102212464, %v1377
        %v1387 = vor.u32 %v1385, %v1386
        %v1388 = vshll.u32 2102212464, %v1376
        %v1389 = vshrl.u32 920167782, %v1377
        %v1390 = vor.u32 %v1388, %v1389
        %v1391 = vshll.u32 920167782, %v1376
        %v1392 = vshrl.u32 1326507024, %v1377
        %v1393 = vor.u32 %v1391, %v1392
        %vm1394 = vcmp.lt.s32.totalorder %v1375, 1
        %vm1395 = vcmp.lt.s32.totalorder %v1375, 2
        %vm1396 = vcmp.lt.s32.totalorder %v1375, 3
        %vm1397 = vcmp.lt.s32.totalorder %v1375, 4
        %v1398 = vsel %vm1394, %v1378, %v1381
        %v1399 = vsel %vm1397, %v1387, 2102212464
        %v1400 = vsel %vm1396, %v1384, %v1399
        %v1401 = vsel %vm1395, %v1398, %v1400
        %v1402 = vsel %vm1394, %v1381, %v1384
        %v1403 = vsel %vm1397, %v1390, 920167782
        %v1404 = vsel %vm1396, %v1387, %v1403
        %v1405 = vsel %vm1395, %v1402, %v1404
        %v1406 = vsel %vm1394, %v1384, %v1387
        %v1407 = vsel %vm1397, %v1393, 1326507024
        %v1408 = vsel %vm1396, %v1390, %v1407
        %v1409 = vsel %vm1395, %v1406, %v1408
        %v1410 = vshll.u32 %v1370, 8
        %v1411 = vmul.u32.u64.compose %v1410, %v1409
        %v1412 = vextract.low.u32 %v1411
        %v1413 = vextract.high.u32 %v1411
        %v1414 = vmul.u32.u64.compose %v1410, %v1405
        %v1415 = vextract.low.u32 %v1414
        %v1416 = vextract.high.u32 %v1414
        %v1417 = vmul.u32 %v1410, %v1401
        %v1418 = vadd.s32 %v1413, %v1415
        %vm1419 = vc.u32 %v1413, %v1415
        %v1420 = vadd.s32 %v1416, 1
        %v1421 = vsel %vm1419, %v1420, %v1416
        %v1422 = vadd.s32 %v1417, %v1421
        %v1423 = vadd.s32 %v1422, 536870912
        %v1424 = vshrl.u32 %v1423, 30
        %v1425 = vshll.u32 %v1424, 30
        %v1426 = vsub.s32 %v1422, %v1425
        %vm1427 = vcmp.lt.s32.totalorder %v1426, 0
        %v1428 = vsub.s32 0, %v1426
        %v1429 = vsel %vm1427, %v1428, %v1426
        %v1430 = vclz %v1429
        %v1431 = vsub.s32 %v1430, 2
        %vm1432 = vcmp.gt.s32.totalorder 0, %v1431
        %v1433 = vsel %vm1432, 0, %v1431
        %v1434 = vsub.s32 32, %v1433
        %v1435 = vshll.u32 %v1426, %v1433
        %v1436 = vshrl.u32 %v1418, %v1434
        %v1437 = vor.u32 %v1435, %v1436
        %v1438 = vsub.s32 4294967266, %v1433
        %v1439 = vadd.s32 %v1438, 127
        %v1440 = vshll.u32 %v1439, 23
        %v1441 = vor.u32 4788187, %v1440
        %v1442 = vand.u32 2147483647, %v1441
        %v1444 = vcvt.s32.f32 %v1437
        %v1445 = vmul.f32 %v1444, %v1442
        %v1446 = vxor.u32 %v1445, 2147483648
        %v1447 = vsel %vm1364, %v1446, %v1445
        %v1448 = vsub.s32 4, %v1424
        %v1449 = vsel %vm1364, %v1448, %v1424
        %v1450 = vsel %vm1363, %v1049, %v1447
        %v1451 = vsel %vm1363, 0, %v1449
        %v1452 = vcosq.f32.pop %v1450
        %v1453 = vsinq.f32.pop %v1450
        %vm1454 = vweird.f32 %v1049
        %v1455 = vadd.s32 %v1451, 3
        %v1456 = vand.u32 %v1455, 3
        %vm1457 = vcmp.lt.s32.totalorder %v1456, 2
        %vm1458 = vcmp.eq.s32.totalorder %v1456, 0
        %v1459 = vxor.u32 %v1453, 2147483648
        %v1460 = vsel %vm1458, %v1452, %v1459
        %vm1461 = vcmp.eq.s32.totalorder %v1456, 2
        %v1462 = vxor.u32 %v1452, 2147483648
        %v1463 = vsel %vm1461, %v1462, %v1453
        %v1464 = vsel %vm1457, %v1460, %v1463
        %v1465 = vsel %vm1454, nan, %v1464
        %v1467 = vsel %vm787, %v1361, 0
        %v1470 = vsel %vm787, %v1465, 0
        %1472 = vmatprep.subr.mxu0 0.0
        %1473 = vmatpush1.msra.mxu0 %v785
        %1474 = vmatprep.subr.mxu0 0.0
        %1475 = vmatpush1.msra.mxu0 %v786
        %1476 = vmatprep.subr.mxu0 0.0
        %1477 = vmatpush1.msra.mxu0 0.0
        %1478 = vmatprep.subr.mxu0 0.0
        %1479 = vmatpush1.msra.mxu0 0.0
        %1480 = vmatprep.subr.mxu0 0.0
        %1481 = vmatpush1.msra.mxu0 0.0
        %1482 = vmatprep.subr.mxu0 0.0
        %1483 = vmatpush1.msra.mxu0 0.0
        %1484 = vmatprep.subr.mxu0 0.0
        %1485 = vmatpush1.msra.mxu0 0.0
        %1486 = vmatprep.subr.mxu0 0.0
        %1487 = vmatpush1.msra.mxu0 0.0
        %1488 = vmatprep.subr.mxu0 0.0
        %1489 = vmatpush1.msra.mxu0 0.0
        %1490 = vmatprep.subr.mxu0 0.0
        %1491 = vmatpush1.msra.mxu0 0.0
        %1492 = vmatprep.subr.mxu0 0.0
        %1493 = vmatpush1.msra.mxu0 0.0
        %1494 = vmatprep.subr.mxu0 0.0
        %1495 = vmatpush1.msra.mxu0 0.0
        %1496 = vmatprep.subr.mxu0 0.0
        %1497 = vmatpush1.msra.mxu0 0.0
        %1498 = vmatprep.subr.mxu0 0.0
        %1499 = vmatpush1.msra.mxu0 0.0
        %1500 = vmatprep.subr.mxu0 0.0
        %1501 = vmatpush1.msra.mxu0 0.0
        %1502 = vmatprep.subr.mxu0 0.0
        %1503 = vmatpush1.msra.mxu0 0.0
        %1504 = vmatprep.subr.mxu0 0.0
        %1505 = vmatpush1.msra.mxu0 0.0
        %1506 = vmatprep.subr.mxu0 0.0
        %1507 = vmatpush1.msra.mxu0 0.0
        %1508 = vmatprep.subr.mxu0 0.0
        %1509 = vmatpush1.msra.mxu0 0.0
        %1510 = vmatprep.subr.mxu0 0.0
        %1511 = vmatpush1.msra.mxu0 0.0
        %1512 = vmatprep.subr.mxu0 0.0
        %1513 = vmatpush1.msra.mxu0 0.0
        %1514 = vmatprep.subr.mxu0 0.0
        %1515 = vmatpush1.msra.mxu0 0.0
        %1516 = vmatprep.subr.mxu0 0.0
        %1517 = vmatpush1.msra.mxu0 0.0
        %1518 = vmatprep.subr.mxu0 0.0
        %1519 = vmatpush1.msra.mxu0 0.0
        %1520 = vmatprep.subr.mxu0 0.0
        %1521 = vmatpush1.msra.mxu0 0.0
        %1522 = vmatprep.subr.mxu0 0.0
        %1523 = vmatpush1.msra.mxu0 0.0
        %1524 = vmatprep.subr.mxu0 0.0
        %1525 = vmatpush1.msra.mxu0 0.0
        %1526 = vmatprep.subr.mxu0 0.0
        %1527 = vmatpush1.msra.mxu0 0.0
        %1528 = vmatprep.subr.mxu0 0.0
        %1529 = vmatpush1.msra.mxu0 0.0
        %1530 = vmatprep.subr.mxu0 0.0
        %1531 = vmatpush1.msra.mxu0 0.0
        %1532 = vmatprep.subr.mxu0 0.0
        %1533 = vmatpush1.msra.mxu0 0.0
        %1534 = vmatprep.subr.mxu0 0.0
        %1535 = vmatpush1.msra.mxu0 0.0
        %1536 = vmatprep.mubr.f32.mxu0 0.0
        %1537 = vmatmul.mubr.f32.gmra.mrb[0].mxu0 %v1467
        %v1538 = vpop.f32.mrb[0].mxu0
        %v1539 = vadd.f32 0.0, %v1538
        %v1540 = vpop.f32.mrb[0].mxu0
        %1541 = vmatprep.mubr.f32.mxu0 0.0
        %1542 = vmatmul.mubr.f32.gmra.mrb[0].mxu0 %v1470
        %v1543 = vpop.f32.mrb[0].mxu0
        %v1544 = vadd.f32 0.0, %v1543
        %v1545 = vpop.f32.mrb[0].mxu0
        %1546 = vdwg.mxu0
        %v1548 = vsel %vm787, %v1154, 0
        %v1551 = vsel %vm787, %v1257, 0
        %1553 = vmatprep.subr.mxu0 0.0
        %1554 = vmatpush1.msra.mxu0 %v783
        %1555 = vmatprep.subr.mxu0 0.0
        %1556 = vmatpush1.msra.mxu0 %v784
        %1557 = vmatprep.subr.mxu0 0.0
        %1558 = vmatpush1.msra.mxu0 0.0
        %1559 = vmatprep.subr.mxu0 0.0
        %1560 = vmatpush1.msra.mxu0 0.0
        %1561 = vmatprep.subr.mxu0 0.0
        %1562 = vmatpush1.msra.mxu0 0.0
        %1563 = vmatprep.subr.mxu0 0.0
        %1564 = vmatpush1.msra.mxu0 0.0
        %1565 = vmatprep.subr.mxu0 0.0
        %1566 = vmatpush1.msra.mxu0 0.0
        %1567 = vmatprep.subr.mxu0 0.0
        %1568 = vmatpush1.msra.mxu0 0.0
        %1569 = vmatprep.subr.mxu0 0.0
        %1570 = vmatpush1.msra.mxu0 0.0
        %1571 = vmatprep.subr.mxu0 0.0
        %1572 = vmatpush1.msra.mxu0 0.0
        %1573 = vmatprep.subr.mxu0 0.0
        %1574 = vmatpush1.msra.mxu0 0.0
        %1575 = vmatprep.subr.mxu0 0.0
        %1576 = vmatpush1.msra.mxu0 0.0
        %1577 = vmatprep.subr.mxu0 0.0
        %1578 = vmatpush1.msra.mxu0 0.0
        %1579 = vmatprep.subr.mxu0 0.0
        %1580 = vmatpush1.msra.mxu0 0.0
        %1581 = vmatprep.subr.mxu0 0.0
        %1582 = vmatpush1.msra.mxu0 0.0
        %1583 = vmatprep.subr.mxu0 0.0
        %1584 = vmatpush1.msra.mxu0 0.0
        %1585 = vmatprep.subr.mxu0 0.0
        %1586 = vmatpush1.msra.mxu0 0.0
        %1587 = vmatprep.subr.mxu0 0.0
        %1588 = vmatpush1.msra.mxu0 0.0
        %1589 = vmatprep.subr.mxu0 0.0
        %1590 = vmatpush1.msra.mxu0 0.0
        %1591 = vmatprep.subr.mxu0 0.0
        %1592 = vmatpush1.msra.mxu0 0.0
        %1593 = vmatprep.subr.mxu0 0.0
        %1594 = vmatpush1.msra.mxu0 0.0
        %1595 = vmatprep.subr.mxu0 0.0
        %1596 = vmatpush1.msra.mxu0 0.0
        %1597 = vmatprep.subr.mxu0 0.0
        %1598 = vmatpush1.msra.mxu0 0.0
        %1599 = vmatprep.subr.mxu0 0.0
        %1600 = vmatpush1.msra.mxu0 0.0
        %1601 = vmatprep.subr.mxu0 0.0
        %1602 = vmatpush1.msra.mxu0 0.0
        %1603 = vmatprep.subr.mxu0 0.0
        %1604 = vmatpush1.msra.mxu0 0.0
        %1605 = vmatprep.subr.mxu0 0.0
        %1606 = vmatpush1.msra.mxu0 0.0
        %1607 = vmatprep.subr.mxu0 0.0
        %1608 = vmatpush1.msra.mxu0 0.0
        %1609 = vmatprep.subr.mxu0 0.0
        %1610 = vmatpush1.msra.mxu0 0.0
        %1611 = vmatprep.subr.mxu0 0.0
        %1612 = vmatpush1.msra.mxu0 0.0
        %1613 = vmatprep.subr.mxu0 0.0
        %1614 = vmatpush1.msra.mxu0 0.0
        %1615 = vmatprep.subr.mxu0 0.0
        %1616 = vmatpush1.msra.mxu0 0.0
        %1617 = vmatprep.mubr.f32.mxu0 0.0
        %1618 = vmatmul.mubr.f32.gmra.mrb[0].mxu0 %v1548
        %v1619 = vpop.f32.mrb[0].mxu0
        %v1620 = vadd.f32 %v1539, %v1619
        %v1621 = vpop.f32.mrb[0].mxu0
        %1622 = vmatprep.mubr.f32.mxu0 0.0
        %1623 = vmatmul.mubr.f32.gmra.mrb[0].mxu0 %v1551
        %v1624 = vpop.f32.mrb[0].mxu0
        %v1625 = vadd.f32 %v1544, %v1624
        %v1626 = vpop.f32.mrb[0].mxu0
        %1627 = vdwg.mxu0
        %v1628 = vadd.f32 %v1620, %v955
        %v1629 = vadd.f32 %v1625, %v955
        %v1630 = vmul.f32 %v1628, 0.5
        %v1631 = vmul.f32 %v1629, 0.5
        %v1632 = vmul.f32 %v1628, 0.70710677
        %v1633 = vmul.f32 %v1629, 0.70710677
        %v1634 = verf.f32.pop %v1632
        %v1635 = verf.f32.pop %v1633
        %v1636 = vadd.f32 %v1634, 1.0
        %v1637 = vadd.f32 %v1635, 1.0
        %v1638 = vmul.f32 %v1630, %v1636
        %v1639 = vmul.f32 %v1631, %v1637
        %1642 = vrot.lane.b32.xlu0 %v1638, 32
        %v1643 = vpop.permute.xlu0 %1642
        %1644 = vrot.lane.b32.xlu0 %v1639, 32
        %v1645 = vpop.permute.xlu0 %1644
        %vm1648 = vcmask 261120
        %v1649 = vsel %vm1648, %v967, %v1643
        %v1650 = vsel %vm1648, %v968, %v1645
        %v1651 = vld [vmem:[%s5] sm:$0xff]
        %v1652 = vld [vmem:[%s5 + $0x8] sm:$0xff]
        %v1653 = vld [vmem:[%s5 + $0x10] sm:$0xff]
        %v1654 = vld [vmem:[%s5 + $0x18] sm:$0xff]
        %v1655 = vld [vmem:[%s5 + $0x20] sm:$0xff]
        %v1656 = vld [vmem:[%s5 + $0x28] sm:$0xff]
        %v1657 = vld [vmem:[%s5 + $0x30] sm:$0xff]
        %v1658 = vld [vmem:[%s5 + $0x38] sm:$0xff]
        %v1659 = vld [vmem:[%s6] sm:$0x1]
        %v1661 = vlaneseq
        %v1662 = vshrl.u32 %v1661, 7
        %v1663 = vsub.s32 0, %v1662
        %v1664 = vrot.slane %v1659, %v1663
        %vm1666 = vcmask 523264
        %v1668 = vsel %vm1666, %v1649, 0
        %v1671 = vsel %vm1666, %v1650, 0
        %1673 = vmatprep.subr.mxu0 0.0
        %1674 = vmatpush1.msra.mxu0 %v1651
        %1675 = vmatprep.subr.mxu0 0.0
        %1676 = vmatpush1.msra.mxu0 %v1652
        %1677 = vmatprep.subr.mxu0 0.0
        %1678 = vmatpush1.msra.mxu0 %v1653
        %1679 = vmatprep.subr.mxu0 0.0
        %1680 = vmatpush1.msra.mxu0 %v1654
        %1681 = vmatprep.subr.mxu0 0.0
        %1682 = vmatpush1.msra.mxu0 %v1655
        %1683 = vmatprep.subr.mxu0 0.0
        %1684 = vmatpush1.msra.mxu0 %v1656
        %1685 = vmatprep.subr.mxu0 0.0
        %1686 = vmatpush1.msra.mxu0 %v1657
        %1687 = vmatprep.subr.mxu0 0.0
        %1688 = vmatpush1.msra.mxu0 %v1658
        %1689 = vmatprep.subr.mxu0 0.0
        %1690 = vmatpush1.msra.mxu0 0.0
        %1691 = vmatprep.subr.mxu0 0.0
        %1692 = vmatpush1.msra.mxu0 0.0
        %1693 = vmatprep.subr.mxu0 0.0
        %1694 = vmatpush1.msra.mxu0 0.0
        %1695 = vmatprep.subr.mxu0 0.0
        %1696 = vmatpush1.msra.mxu0 0.0
        %1697 = vmatprep.subr.mxu0 0.0
        %1698 = vmatpush1.msra.mxu0 0.0
        %1699 = vmatprep.subr.mxu0 0.0
        %1700 = vmatpush1.msra.mxu0 0.0
        %1701 = vmatprep.subr.mxu0 0.0
        %1702 = vmatpush1.msra.mxu0 0.0
        %1703 = vmatprep.subr.mxu0 0.0
        %1704 = vmatpush1.msra.mxu0 0.0
        %1705 = vmatprep.subr.mxu0 0.0
        %1706 = vmatpush1.msra.mxu0 0.0
        %1707 = vmatprep.subr.mxu0 0.0
        %1708 = vmatpush1.msra.mxu0 0.0
        %1709 = vmatprep.subr.mxu0 0.0
        %1710 = vmatpush1.msra.mxu0 0.0
        %1711 = vmatprep.subr.mxu0 0.0
        %1712 = vmatpush1.msra.mxu0 0.0
        %1713 = vmatprep.subr.mxu0 0.0
        %1714 = vmatpush1.msra.mxu0 0.0
        %1715 = vmatprep.subr.mxu0 0.0
        %1716 = vmatpush1.msra.mxu0 0.0
        %1717 = vmatprep.subr.mxu0 0.0
        %1718 = vmatpush1.msra.mxu0 0.0
        %1719 = vmatprep.subr.mxu0 0.0
        %1720 = vmatpush1.msra.mxu0 0.0
        %1721 = vmatprep.subr.mxu0 0.0
        %1722 = vmatpush1.msra.mxu0 0.0
        %1723 = vmatprep.subr.mxu0 0.0
        %1724 = vmatpush1.msra.mxu0 0.0
        %1725 = vmatprep.subr.mxu0 0.0
        %1726 = vmatpush1.msra.mxu0 0.0
        %1727 = vmatprep.subr.mxu0 0.0
        %1728 = vmatpush1.msra.mxu0 0.0
        %1729 = vmatprep.subr.mxu0 0.0
        %1730 = vmatpush1.msra.mxu0 0.0
        %1731 = vmatprep.subr.mxu0 0.0
        %1732 = vmatpush1.msra.mxu0 0.0
        %1733 = vmatprep.subr.mxu0 0.0
        %1734 = vmatpush1.msra.mxu0 0.0
        %1735 = vmatprep.subr.mxu0 0.0
        %1736 = vmatpush1.msra.mxu0 0.0
        %1737 = vmatprep.mubr.f32.mxu0 0.0
        %1738 = vmatmul.mubr.f32.gmra.mrb[0].mxu0 %v1668
        %v1739 = vpop.f32.mrb[0].mxu0
        %v1740 = vadd.f32 %v1664, %v1739
        %v1741 = vpop.f32.mrb[0].mxu0
        %1742 = vmatprep.mubr.f32.mxu0 0.0
        %1743 = vmatmul.mubr.f32.gmra.mrb[0].mxu0 %v1671
        %v1744 = vpop.f32.mrb[0].mxu0
        %v1745 = vadd.f32 %v1664, %v1744
        %v1746 = vpop.f32.mrb[0].mxu0
        %1747 = vdwg.mxu0
        %1748 = vst.msk [vmem:[%s272] sm:$0xff] %vm1648, %v1740
        %1749 = vst.msk [vmem:[%s272 + $0x8] sm:$0xff] %vm1648, %v1745
        %s1750 = sand.u32 %s181, 1
        %s1751 = scalar_lea.sflag [#allocation3], %s1750
        %s1752 = sand.u32 %s181, 1
        %s1753 = smul.addr %s1752, 16
        %s1754 = scalar_lea.vmem [#allocation2], %s1753
        // Predicated region
        $region49: #{tpu_custom_call.1} parent=47 // pred_check
          %p1755 = pneg %p191
        $region50: #{tpu_custom_call.1} parent=47 // pred_check_branch
          %1757 = sbr.rel (%p1755) target = $region52
        $region51: #{tpu_custom_call.1} parent=47 // pred_region
          %s1758 = smul.u32 2, %s21
          %s1760 = ssub.s32 256, 256
          %1761 = vsyncadd %s1751, %s1760
          %s1762 = smul.addr %s1758, 128
          %s1763 = scalar_lea.hbm %s7, %s1762
          %s1764 = sshll.u32 %s1754, 4
          %s1765 = int_to_ptr.vmem [resolvable:$true] %s1764
          %1770 = dma.vmem_to_hbm [thread:$0]  %s1765, 256, %s1763, %s1751, 128, 128, 8
        $region52: #{tpu_custom_call.1} parent=47 // pred_fallthru
          _
      $region48: #{tpu_custom_call.1} parent=5 // pred_fallthru
        _
      %p1771 = scmp.le.s32.totalorder 2, %s16
      // Predicated region
      $region53: #{tpu_custom_call.1} parent=5 // pred_check
        %p1772 = pneg %p1771
      $region54: #{tpu_custom_call.1} parent=5 // pred_check_branch
        %1774 = sbr.rel (%p1772) target = $region56
      $region55: #{tpu_custom_call.1} parent=5 // pred_region
        %s1775 = ssub.s32 %s16, 2
        // Predicated region
        $region57: #{tpu_custom_call.1} parent=55 // pred_check
          %p1776 = pneg %p197
        $region58: #{tpu_custom_call.1} parent=55 // pred_check_branch
          %1778 = sbr.rel (%p1776) target = $region60
        $region59: #{tpu_custom_call.1} parent=55 // pred_region
          %s1779 = sand.u32 %s182, 1
          %s1780 = scalar_lea.sflag [#allocation3], %s1779
          %s1781 = sand.u32 %s182, 1
          %s1782 = smul.addr %s1781, 16
          %s1783 = scalar_lea.vmem [#allocation2], %s1782
          %1784 = dma.done %s1780, 256
        $region60: #{tpu_custom_call.1} parent=55 // pred_fallthru
          _
      $region56: #{tpu_custom_call.1} parent=5 // pred_fallthru
        _
    $region6: #{tpu_custom_call.1} parent=1 // loop_footer
      %s20 = sadd.s32 1, %s16
    $region7: #{tpu_custom_call.1} parent=1 // loop_footer_branch
      %15 = sbr.rel target = $region3
    $region8: #{tpu_custom_call.1} parent=1 // loop_exit
      _
    %1785 = vsyncpa [#allocation3], 1
    %s1786 = scalar_lea.sflag [#allocation3], 1
    %1787 = vsyncpa %s1786, 1

</llo_original>
